<compile_context>
chip_gen: v6e
topology: v6e:2x2x1
jax: 0.10.0
libtpu: 0.0.40
codegen_flags: <defaults>
</compile_context>

<pallas_src>
import functools

import jax
import jax.numpy as jnp
import numpy as np
from jax.experimental import pallas as pl
from jax.experimental.pallas import tpu as pltpu


def _duc_kernel(x_ref, w_ref, shift_ref, o_ref, cols_ref, *, th, W, Cin):
    """Fused 3x3 conv (im2col GEMM) + per-channel shift + ReLU for one tile.

    x_ref:     (1, H+2, W+2, Cin)   padded input, resident per batch element
    w_ref:     (9*Cin, co_tile)     BN-scale-folded conv weights (tap-major rows)
    shift_ref: (1, co_tile)         folded BN shift (includes conv bias)
    o_ref:     (1, th*W, co_tile)   lane-dense output tile
    cols_ref:  (th*W, 9*Cin)        VMEM scratch: im2col columns for this H-tile
    """
    h = pl.program_id(1)   # H-tile index
    c = pl.program_id(2)   # Cout-tile index (innermost, "arbitrary")

    # Build the im2col matrix once per (n, h) tile; reuse it for every Cout tile.
    @pl.when(c == 0)
    def _build_cols():
        row0 = h * th
        for kh in range(3):
            for kw in range(3):
                tap = kh * 3 + kw
                patch = x_ref[0, pl.ds(row0 + kh, th), kw:kw + W, :]   # (th, W, Cin)
                cols_ref[:, tap * Cin:(tap + 1) * Cin] = patch.reshape(th * W, Cin)

    # Single MXU GEMM: (th*W, 9*Cin) @ (9*Cin, co_tile) -> f32 accumulate.
    y = jnp.dot(cols_ref[...], w_ref[...], preferred_element_type=jnp.float32)
    y = jnp.maximum(y + shift_ref[0, :], 0.0)          # folded BN shift + ReLU
    o_ref[0] = y.astype(o_ref.dtype)


def _pick_th(H, W, max_rows):
    """Largest divisor th of H with th*W <= max_rows and (th*W) % 8 == 0."""
    for th in range(H, 0, -1):
        if H % th:
            continue
        if th * W <= max_rows and (th * W) % 8 == 0:
            return th
    return H   # fallback: full height (block == full array dim, always legal)


def duc_forward(x_nchw, weight, bias, gamma, beta, running_mean, running_var,
                *, down_factor, num_classes, eps=1e-5,
                max_rows_per_tile=2048, co_tile=None, compute_dtype=jnp.float32):
    """Forward pass of _DenseUpsamplingConvModule.

    x_nchw : (N, Cin, H, W) float32
    weight : (Cout, Cin, 3, 3)  (PyTorch Conv2d layout), Cout = r^2 * num_classes
    returns: (N, num_classes, H*r, W*r) float32
    """
    N, Cin, H, W = x_nchw.shape
    r = down_factor
    Cout = r * r * num_classes
    assert weight.shape == (Cout, Cin, 3, 3)

    # ---- tiling ------------------------------------------------------------
    Cout_p = ((Cout + 127) // 128) * 128          # lane-dense output channels
    if co_tile is None:                           # full MXU N-width on v6e/v7x when possible
        co_tile = 256 if (Cout_p % 256 == 0) else 128
    assert Cout_p % co_tile == 0
    COT = Cout_p // co_tile
    th = _pick_th(H, W, max_rows_per_tile)
    HT = H // th

    # ---- wrapper-side prep (fused by XLA around the kernel) -----------------
    # NCHW -> NHWC, pad H/W by 1 (conv padding=1).
    x_nhwc = jnp.transpose(x_nchw, (0, 2, 3, 1))
    x_pad = jnp.pad(x_nhwc, ((0, 0), (1, 1), (1, 1), (0, 0))).astype(compute_dtype)

    # Fold conv bias + BN(eval): y = conv(x)*scale + shift, scale folded into W.
    inv_std = jax.lax.rsqrt(running_var.astype(jnp.float32) + eps)
    scale = gamma.astype(jnp.float32) * inv_std                                  # (Cout,)
    shift = beta.astype(jnp.float32) + (bias - running_mean) * scale             # (Cout,)

    # (Cout, Cin, 3, 3) -> (kh, kw, Cin, Cout) -> (9*Cin, Cout), row = tap*Cin + ci
    w_gemm = jnp.transpose(weight.astype(jnp.float32), (2, 3, 1, 0)).reshape(9 * Cin, Cout)
    w_gemm = w_gemm * scale[None, :]                                             # fold BN scale
    # Pad Cout to Cout_p (padded channels produce relu(0)=0, sliced off later).
    w_gemm = jnp.pad(w_gemm, ((0, 0), (0, Cout_p - Cout))).astype(compute_dtype)
    shift_p = jnp.pad(shift, (0, Cout_p - Cout)).reshape(1, Cout_p).astype(jnp.float32)

    kernel = functools.partial(_duc_kernel, th=th, W=W, Cin=Cin)

    # ---- compiler params / cost estimate ------------------------------------
    itemsize = jnp.dtype(compute_dtype).itemsize
    vmem_est = (2 * (H + 2) * (W + 2) * Cin * itemsize      # input (double-buffered)
                + 2 * 9 * Cin * co_tile * itemsize          # weight slab
                + 2 * Cout_p * 4                            # shift
                + 2 * th * W * co_tile * 4                  # output tile
                + th * W * 9 * Cin * itemsize)              # im2col scratch
    cp_kwargs = dict(dimension_semantics=("parallel", "parallel", "arbitrary"))
    if vmem_est > 24 * 1024 * 1024:
        cp_kwargs["vmem_limit_bytes"] = int(min(vmem_est * 1.5 + (8 << 20), 96 << 20))
    compiler_params = pltpu.CompilerParams(**cp_kwargs)

    cost = pl.CostEstimate(
        flops=int(2 * N * H * W * 9 * Cin * Cout_p),
        transcendentals=0,
        bytes_accessed=int(x_pad.size * itemsize + w_gemm.size * itemsize
                           + shift_p.size * 4 + N * H * W * Cout_p * 4),
    )

    # ---- fused conv + BN + ReLU kernel --------------------------------------
    y_flat = pl.pallas_call(
        kernel,
        out_shape=jax.ShapeDtypeStruct((N, H * W, Cout_p), jnp.float32),
        grid_spec=pltpu.PrefetchScalarGridSpec(
            num_scalar_prefetch=0,
            grid=(N, HT, COT),
            in_specs=[
                # padded image: resident per batch element (re-DMA only when n changes)
                pl.BlockSpec((1, H + 2, W + 2, Cin), lambda n, h, c: (n, 0, 0, 0)),
                # weight slab for this Cout tile
                pl.BlockSpec((9 * Cin, co_tile), lambda n, h, c: (0, c)),
                # shift for this Cout tile
                pl.BlockSpec((1, co_tile), lambda n, h, c: (0, c)),
            ],
            out_specs=pl.BlockSpec((1, th * W, co_tile), lambda n, h, c: (n, h, c)),
            scratch_shapes=[pltpu.VMEM((th * W, 9 * Cin), compute_dtype)],
        ),
        compiler_params=compiler_params,
        cost_estimate=cost,
    )(x_pad, w_gemm, shift_p)

    # ---- pixel shuffle (+ drop Cout padding), one fused XLA pass -------------
    # PyTorch PixelShuffle: out[n, cls, h*r+i, w*r+j] = y[n, cls*r^2 + i*r + j, h, w]
    y = y_flat[:, :, :Cout].reshape(N, H, W, num_classes, r, r)
    y = jnp.transpose(y, (0, 3, 1, 4, 2, 5))                 # (N, C, H, r, W, r)
    return y.reshape(N, num_classes, H * r, W * r)


# Jitted entry point: fuses layout prep + pallas kernel + pixel shuffle into one program.
duc_forward_jit = jax.jit(
    duc_forward,
    static_argnames=("down_factor", "num_classes", "eps",
                     "max_rows_per_tile", "co_tile", "compute_dtype"))


def _reference(x_nchw, weight, bias, gamma, beta, rm, rv, *, down_factor, num_classes, eps=1e-5):
    """Pure-JAX reference (lax conv) for correctness check."""
    y = jax.lax.conv_general_dilated(
        x_nchw, weight, window_strides=(1, 1), padding=((1, 1), (1, 1)),
        dimension_numbers=("NCHW", "OIHW", "NCHW"))
    y = y + bias[None, :, None, None]
    y = (y - rm[None, :, None, None]) * jax.lax.rsqrt(rv + eps)[None, :, None, None]
    y = y * gamma[None, :, None, None] + beta[None, :, None, None]
    y = jnp.maximum(y, 0.0)
    N, C, H, W = y.shape
    r = down_factor
    y = y.reshape(N, num_classes, r, r, H, W)
    y = jnp.transpose(y, (0, 1, 4, 2, 5, 3))
    return y.reshape(N, num_classes, H * r, W * r)


if __name__ == "__main__":
    def _run_case(key, *, N, Cin, H, W, r, nc, max_rows, co_tile=None):
        Cout = r * r * nc
        k = jax.random.split(key, 7)
        x = jax.random.normal(k[0], (N, Cin, H, W), dtype=jnp.float32)
        weight = 0.1 * jax.random.normal(k[1], (Cout, Cin, 3, 3), dtype=jnp.float32)
        bias = 0.05 * jax.random.normal(k[2], (Cout,), dtype=jnp.float32)
        gamma = 1.0 + 0.1 * jax.random.normal(k[3], (Cout,), dtype=jnp.float32)
        beta = 0.1 * jax.random.normal(k[4], (Cout,), dtype=jnp.float32)
        rm = 0.1 * jax.random.normal(k[5], (Cout,), dtype=jnp.float32)
        rv = jnp.abs(1.0 + 0.1 * jax.random.normal(k[6], (Cout,), dtype=jnp.float32))

        out = duc_forward_jit(x, weight, bias, gamma, beta, rm, rv,
                              down_factor=r, num_classes=nc,
                              max_rows_per_tile=max_rows, co_tile=co_tile)
        out = jax.block_until_ready(out)
        ref = _reference(x, weight, bias, gamma, beta, rm, rv, down_factor=r, num_classes=nc)
        np.testing.assert_allclose(np.asarray(out), np.asarray(ref), rtol=1e-4, atol=1e-4)
        assert out.shape == (N, nc, H * r, W * r)

    key = jax.random.PRNGKey(0)
    k1, k2, k3 = jax.random.split(key, 3)
    # Case 1: small baseline config (single H-tile, single 128-wide Cout-tile).
    _run_case(k1, N=2, Cin=4, H=16, W=16, r=2, nc=3, max_rows=2048)
    # Case 2: multi H-tile (halo slicing) + Cout lane-padding 144 -> 256 with the
    # adaptive 256-wide Cout tile (full MXU N-width on v6e/v7x).
    _run_case(k2, N=1, Cin=8, H=32, W=32, r=4, nc=9, max_rows=256)
    # Case 3: multi Cout-tile path (Cout 280 -> padded 384 -> 3 tiles of 128),
    # exercising im2col scratch reuse across Cout tiles via pl.when.
    _run_case(k3, N=1, Cin=8, H=16, W=16, r=2, nc=70, max_rows=128, co_tile=128)

    print("KERNEL_OK")
</pallas_src>

<mosaic_0001>
module attributes {stable_mosaic.version = 11 : i64} {
  func.func @_duc_kernel(%arg0: i32, %arg1: i32, %arg2: i32, %arg3: memref<1x18x18x4xf32, #tpu.memory_space<vmem>>, %arg4: memref<36x128xf32, #tpu.memory_space<vmem>>, %arg5: memref<1x128xf32, #tpu.memory_space<vmem>>, %arg6: memref<1x256x128xf32, #tpu.memory_space<vmem>>, %arg7: memref<256x36xf32, #tpu.memory_space<vmem>>) attributes {dimension_semantics = [#tpu.dimension_semantics<parallel>, #tpu.dimension_semantics<parallel>, #tpu.dimension_semantics<arbitrary>], iteration_bounds = array<i64: 2, 1, 1>, scalar_prefetch = 0 : i64, scratch_operands = 1 : i64, tpu.core_type = #tpu.core_type<tc>, window_params = [{transform_indices = @transform_0, window_bounds = array<i64: 1, 18, 18, 4>}, {transform_indices = @transform_1, window_bounds = array<i64: 36, 128>}, {transform_indices = @transform_2, window_bounds = array<i64: 1, 128>}, {transform_indices = @transform_3, window_bounds = array<i64: 1, 256, 128>}]} {
    %c0_i32 = arith.constant 0 : i32
    %0 = arith.cmpi eq, %arg2, %c0_i32 : i32
    %1 = arith.extui %0 : i1 to i32
    %c0_i32_0 = arith.constant 0 : i32
    %2 = arith.cmpi ne, %1, %c0_i32_0 : i32
    scf.if %2 {
      %c16_i32 = arith.constant 16 : i32
      %16 = arith.muli %arg1, %c16_i32 : i32
      %c0_i32_10 = arith.constant 0 : i32
      %17 = arith.addi %16, %c0_i32_10 : i32
      %c0_11 = arith.constant 0 : index
      %18 = arith.index_cast %17 : i32 to index
      %c0_12 = arith.constant 0 : index
      %c0_13 = arith.constant 0 : index
      %19 = vector.load %arg3[%c0_11, %18, %c0_12, %c0_13] : memref<1x18x18x4xf32, #tpu.memory_space<vmem>>, vector<1x16x16x4xf32>
      %20 = vector.shape_cast %19 : vector<1x16x16x4xf32> to vector<16x16x4xf32>
      %21 = vector.shape_cast %20 : vector<16x16x4xf32> to vector<256x4xf32>
      %c0_14 = arith.constant 0 : index
      %c0_15 = arith.constant 0 : index
      %22 = vector.load %arg7[%c0_14, %c0_15] : memref<256x36xf32, #tpu.memory_space<vmem>>, vector<256x4xf32>
      tpu.vector_store %arg7[%c0_14, %c0_15], %21 {strides = array<i32>} : memref<256x36xf32, #tpu.memory_space<vmem>>, vector<256x4xf32>,
      %c0_i32_16 = arith.constant 0 : i32
      %23 = arith.addi %16, %c0_i32_16 : i32
      %c0_17 = arith.constant 0 : index
      %24 = arith.index_cast %23 : i32 to index
      %c1 = arith.constant 1 : index
      %c0_18 = arith.constant 0 : index
      %25 = vector.load %arg3[%c0_17, %24, %c1, %c0_18] : memref<1x18x18x4xf32, #tpu.memory_space<vmem>>, vector<1x16x16x4xf32>
      %26 = vector.shape_cast %25 : vector<1x16x16x4xf32> to vector<16x16x4xf32>
      %27 = vector.shape_cast %26 : vector<16x16x4xf32> to vector<256x4xf32>
      %c0_19 = arith.constant 0 : index
      %c4 = arith.constant 4 : index
      %28 = vector.load %arg7[%c0_19, %c4] : memref<256x36xf32, #tpu.memory_space<vmem>>, vector<256x4xf32>
      tpu.vector_store %arg7[%c0_19, %c4], %27 {strides = array<i32>} : memref<256x36xf32, #tpu.memory_space<vmem>>, vector<256x4xf32>,
      %c0_i32_20 = arith.constant 0 : i32
      %29 = arith.addi %16, %c0_i32_20 : i32
      %c0_21 = arith.constant 0 : index
      %30 = arith.index_cast %29 : i32 to index
      %c2 = arith.constant 2 : index
      %c0_22 = arith.constant 0 : index
      %31 = vector.load %arg3[%c0_21, %30, %c2, %c0_22] : memref<1x18x18x4xf32, #tpu.memory_space<vmem>>, vector<1x16x16x4xf32>
      %32 = vector.shape_cast %31 : vector<1x16x16x4xf32> to vector<16x16x4xf32>
      %33 = vector.shape_cast %32 : vector<16x16x4xf32> to vector<256x4xf32>
      %c0_23 = arith.constant 0 : index
      %c8 = arith.constant 8 : index
      %34 = vector.load %arg7[%c0_23, %c8] : memref<256x36xf32, #tpu.memory_space<vmem>>, vector<256x4xf32>
      tpu.vector_store %arg7[%c0_23, %c8], %33 {strides = array<i32>} : memref<256x36xf32, #tpu.memory_space<vmem>>, vector<256x4xf32>,
      %c1_i32 = arith.constant 1 : i32
      %35 = arith.addi %16, %c1_i32 : i32
      %c0_24 = arith.constant 0 : index
      %36 = arith.index_cast %35 : i32 to index
      %c0_25 = arith.constant 0 : index
      %c0_26 = arith.constant 0 : index
      %37 = vector.load %arg3[%c0_24, %36, %c0_25, %c0_26] : memref<1x18x18x4xf32, #tpu.memory_space<vmem>>, vector<1x16x16x4xf32>
      %38 = vector.shape_cast %37 : vector<1x16x16x4xf32> to vector<16x16x4xf32>
      %39 = vector.shape_cast %38 : vector<16x16x4xf32> to vector<256x4xf32>
      %c0_27 = arith.constant 0 : index
      %c12 = arith.constant 12 : index
      %40 = vector.load %arg7[%c0_27, %c12] : memref<256x36xf32, #tpu.memory_space<vmem>>, vector<256x4xf32>
      tpu.vector_store %arg7[%c0_27, %c12], %39 {strides = array<i32>} : memref<256x36xf32, #tpu.memory_space<vmem>>, vector<256x4xf32>,
      %c1_i32_28 = arith.constant 1 : i32
      %41 = arith.addi %16, %c1_i32_28 : i32
      %c0_29 = arith.constant 0 : index
      %42 = arith.index_cast %41 : i32 to index
      %c1_30 = arith.constant 1 : index
      %c0_31 = arith.constant 0 : index
      %43 = vector.load %arg3[%c0_29, %42, %c1_30, %c0_31] : memref<1x18x18x4xf32, #tpu.memory_space<vmem>>, vector<1x16x16x4xf32>
      %44 = vector.shape_cast %43 : vector<1x16x16x4xf32> to vector<16x16x4xf32>
      %45 = vector.shape_cast %44 : vector<16x16x4xf32> to vector<256x4xf32>
      %c0_32 = arith.constant 0 : index
      %c16 = arith.constant 16 : index
      %46 = vector.load %arg7[%c0_32, %c16] : memref<256x36xf32, #tpu.memory_space<vmem>>, vector<256x4xf32>
      tpu.vector_store %arg7[%c0_32, %c16], %45 {strides = array<i32>} : memref<256x36xf32, #tpu.memory_space<vmem>>, vector<256x4xf32>,
      %c1_i32_33 = arith.constant 1 : i32
      %47 = arith.addi %16, %c1_i32_33 : i32
      %c0_34 = arith.constant 0 : index
      %48 = arith.index_cast %47 : i32 to index
      %c2_35 = arith.constant 2 : index
      %c0_36 = arith.constant 0 : index
      %49 = vector.load %arg3[%c0_34, %48, %c2_35, %c0_36] : memref<1x18x18x4xf32, #tpu.memory_space<vmem>>, vector<1x16x16x4xf32>
      %50 = vector.shape_cast %49 : vector<1x16x16x4xf32> to vector<16x16x4xf32>
      %51 = vector.shape_cast %50 : vector<16x16x4xf32> to vector<256x4xf32>
      %c0_37 = arith.constant 0 : index
      %c20 = arith.constant 20 : index
      %52 = vector.load %arg7[%c0_37, %c20] : memref<256x36xf32, #tpu.memory_space<vmem>>, vector<256x4xf32>
      tpu.vector_store %arg7[%c0_37, %c20], %51 {strides = array<i32>} : memref<256x36xf32, #tpu.memory_space<vmem>>, vector<256x4xf32>,
      %c2_i32 = arith.constant 2 : i32
      %53 = arith.addi %16, %c2_i32 : i32
      %c0_38 = arith.constant 0 : index
      %54 = arith.index_cast %53 : i32 to index
      %c0_39 = arith.constant 0 : index
      %c0_40 = arith.constant 0 : index
      %55 = vector.load %arg3[%c0_38, %54, %c0_39, %c0_40] : memref<1x18x18x4xf32, #tpu.memory_space<vmem>>, vector<1x16x16x4xf32>
      %56 = vector.shape_cast %55 : vector<1x16x16x4xf32> to vector<16x16x4xf32>
      %57 = vector.shape_cast %56 : vector<16x16x4xf32> to vector<256x4xf32>
      %c0_41 = arith.constant 0 : index
      %c24 = arith.constant 24 : index
      %58 = vector.load %arg7[%c0_41, %c24] : memref<256x36xf32, #tpu.memory_space<vmem>>, vector<256x4xf32>
      tpu.vector_store %arg7[%c0_41, %c24], %57 {strides = array<i32>} : memref<256x36xf32, #tpu.memory_space<vmem>>, vector<256x4xf32>,
      %c2_i32_42 = arith.constant 2 : i32
      %59 = arith.addi %16, %c2_i32_42 : i32
      %c0_43 = arith.constant 0 : index
      %60 = arith.index_cast %59 : i32 to index
      %c1_44 = arith.constant 1 : index
      %c0_45 = arith.constant 0 : index
      %61 = vector.load %arg3[%c0_43, %60, %c1_44, %c0_45] : memref<1x18x18x4xf32, #tpu.memory_space<vmem>>, vector<1x16x16x4xf32>
      %62 = vector.shape_cast %61 : vector<1x16x16x4xf32> to vector<16x16x4xf32>
      %63 = vector.shape_cast %62 : vector<16x16x4xf32> to vector<256x4xf32>
      %c0_46 = arith.constant 0 : index
      %c28 = arith.constant 28 : index
      %64 = vector.load %arg7[%c0_46, %c28] : memref<256x36xf32, #tpu.memory_space<vmem>>, vector<256x4xf32>
      tpu.vector_store %arg7[%c0_46, %c28], %63 {strides = array<i32>} : memref<256x36xf32, #tpu.memory_space<vmem>>, vector<256x4xf32>,
      %c2_i32_47 = arith.constant 2 : i32
      %65 = arith.addi %16, %c2_i32_47 : i32
      %c0_48 = arith.constant 0 : index
      %66 = arith.index_cast %65 : i32 to index
      %c2_49 = arith.constant 2 : index
      %c0_50 = arith.constant 0 : index
      %67 = vector.load %arg3[%c0_48, %66, %c2_49, %c0_50] : memref<1x18x18x4xf32, #tpu.memory_space<vmem>>, vector<1x16x16x4xf32>
      %68 = vector.shape_cast %67 : vector<1x16x16x4xf32> to vector<16x16x4xf32>
      %69 = vector.shape_cast %68 : vector<16x16x4xf32> to vector<256x4xf32>
      %c0_51 = arith.constant 0 : index
      %c32 = arith.constant 32 : index
      %70 = vector.load %arg7[%c0_51, %c32] : memref<256x36xf32, #tpu.memory_space<vmem>>, vector<256x4xf32>
      tpu.vector_store %arg7[%c0_51, %c32], %69 {strides = array<i32>} : memref<256x36xf32, #tpu.memory_space<vmem>>, vector<256x4xf32>,
    } else {
    }
    %c0 = arith.constant 0 : index
    %c0_1 = arith.constant 0 : index
    %3 = vector.load %arg7[%c0, %c0_1] : memref<256x36xf32, #tpu.memory_space<vmem>>, vector<256x36xf32>
    %c0_2 = arith.constant 0 : index
    %c0_3 = arith.constant 0 : index
    %4 = vector.load %arg4[%c0_2, %c0_3] : memref<36x128xf32, #tpu.memory_space<vmem>>, vector<36x128xf32>
    %cst = arith.constant dense<0.000000e+00> : vector<256x128xf32>
    %5 = tpu.matmul %3, %4, %cst {dimension_numbers = #tpu.dot_dimension_numbers<[1], [0], [0], [1], [0, 0, 1, 1], [], []>} : vector<256x36xf32>, vector<36x128xf32>, vector<256x128xf32> -> vector<256x128xf32>
    %c0_4 = arith.constant 0 : index
    %c0_5 = arith.constant 0 : index
    %6 = vector.load %arg5[%c0_4, %c0_5] : memref<1x128xf32, #tpu.memory_space<vmem>>, vector<1x128xf32>
    %7 = vector.shape_cast %6 : vector<1x128xf32> to vector<128xf32>
    %8 = vector.shape_cast %7 : vector<128xf32> to vector<1x128xf32>
    %9 = vector.broadcast %8 : vector<1x128xf32> to vector<256x128xf32>
    %10 = arith.addf %5, %9 : vector<256x128xf32>
    %cst_6 = arith.constant 0.000000e+00 : f32
    %11 = vector.broadcast %cst_6 : f32 to vector<256x128xf32>
    %12 = arith.maximumf %10, %11 : vector<256x128xf32>
    %c0_7 = arith.constant 0 : index
    %c0_8 = arith.constant 0 : index
    %c0_9 = arith.constant 0 : index
    %13 = vector.load %arg6[%c0_7, %c0_8, %c0_9] : memref<1x256x128xf32, #tpu.memory_space<vmem>>, vector<1x256x128xf32>
    %14 = vector.shape_cast %13 : vector<1x256x128xf32> to vector<256x128xf32>
    %15 = vector.shape_cast %12 : vector<256x128xf32> to vector<1x256x128xf32>
    tpu.vector_store %arg6[%c0_7, %c0_8, %c0_9], %15 {strides = array<i32>} : memref<1x256x128xf32, #tpu.memory_space<vmem>>, vector<1x256x128xf32>,
    return
  }
  func.func @transform_0(%arg0: i32, %arg1: i32, %arg2: i32) -> (i32, i32, i32, i32) {
    %c0_i32 = arith.constant 0 : i32
    %c0_i32_0 = arith.constant 0 : i32
    %c0_i32_1 = arith.constant 0 : i32
    %c0_i32_2 = arith.constant 0 : i32
    return %arg0, %c0_i32, %c0_i32_0, %c0_i32_1 : i32, i32, i32, i32
  }
  func.func @transform_1(%arg0: i32, %arg1: i32, %arg2: i32) -> (i32, i32) {
    %c0_i32 = arith.constant 0 : i32
    %c0_i32_0 = arith.constant 0 : i32
    return %c0_i32, %arg2 : i32, i32
  }
  func.func @transform_2(%arg0: i32, %arg1: i32, %arg2: i32) -> (i32, i32) {
    %c0_i32 = arith.constant 0 : i32
    %c0_i32_0 = arith.constant 0 : i32
    return %c0_i32, %arg2 : i32, i32
  }
  func.func @transform_3(%arg0: i32, %arg1: i32, %arg2: i32) -> (i32, i32, i32) {
    %c0_i32 = arith.constant 0 : i32
    return %arg0, %arg1, %arg2 : i32, i32, i32
  }
}

</mosaic_0001>

<llo_original>
// kernel: duc_forward.1
$region0: #{duc_forward.1}
  #allocation0 [shape = 'u32[]', space=smem, size = 0x4, offset = 0x4, fixed_abs, tag = 'smem constant byte address 0x4 - core index']
  #allocation1 [shape = 'u32[144,128]{1,0:T(1,128)}', space=vmem, size = 0x12000, scoped, tag = 'internal scratch']
  #allocation2 [shape = 'f32[256,36]{1,0:T(8,128)}', space=vmem, size = 0x20000, scoped, tag = 'scratch operand']
  %s0 = inlined_call_operand.vmem [shape: f32[2,18,18,4], index: 0, kind: input, shape index: {}]
  %s1 = inlined_call_operand.vmem [shape: f32[36,128], index: 1, kind: input, shape index: {}]
  %s2 = inlined_call_operand.vmem [shape: f32[1,128], index: 2, kind: input, shape index: {}]
  %s3 = inlined_call_operand.vmem [shape: f32[2,256,128], index: 3, kind: output, shape index: {}]
  %s4 = sld [smem:[#allocation0]]
  $region49: #{duc_forward.1} parent=0
    _
  %s6 = ssub.s32 1, %s4
  %s7 = scalar_select 0, %s6, %s4
  loop: start=0, step=1, limit=4
  $region2: #{duc_forward.1} parent=0 // loop_pre_header
    _
  $region3: #{duc_forward.1} parent=0 // loop_header
    %s9 = sphi 0, %s13
    %p10 = scmp.ge.s32.totalorder %s9, 4
    %s16 = sphi 0, %s35
    %s17 = sphi 0, %s31
    %s18 = sphi 0, %s27
    %s19 = sphi 0, %s16
    %s20 = sphi 0, %s17
    %s21 = sphi 0, %s18
    %s22 = sphi 0, %s19
    %s23 = sphi 0, %s20
    %s24 = sphi 0, %s21
    %s38 = sphi 0, %s40
    %s41 = sphi 0, %s38
    %s42 = sphi 0, %s41
    %s58 = sphi 0, %s42
    %s64 = sphi 0, %s66
    %s67 = sphi 0, %s64
    %s68 = sphi 0, %s67
    %s84 = sphi 0, %s68
    %s90 = sphi 0, %s92
    %s93 = sphi 0, %s90
    %s94 = sphi 0, %s93
    %s110 = sphi 0, %s94
    %s120 = sphi 0, %s122
    %s123 = sphi 0, %s120
    %s124 = sphi 0, %s123
    %s140 = sphi 0, %s124
  $region4: #{duc_forward.1} parent=0 // loop_header_branch
    %12 = sbr.rel (%p10) target = $region8
  $region5: #{duc_forward.1} parent=0 // loop_body
    %s14 = ssub.s32 %s9, 1
    %s15 = ssub.s32 %s9, 2
    %s25 = sadd.s32 1, %s18
    %p26 = scmp.ge.s32.totalorder %s25, 1
    %s27 = scalar_select %p26, 0, %s25
    %s28 = sadd.s32 1, %s17
    %s29 = scalar_select %p26, %s28, %s17
    %p30 = scmp.ge.s32.totalorder %s29, 1
    %s31 = scalar_select %p30, 0, %s29
    %s32 = sadd.s32 1, %s16
    %s33 = scalar_select %p30, %s32, %s16
    %p34 = scmp.ge.s32.totalorder %s33, 2
    %s35 = scalar_select %p34, 0, %s33
    %s36 = ssub.s32 %s16, %s35
    %p37 = scmp.eq.s32.totalorder %s36, 0
    %s39 = sadd.s32 %s38, 1
    %s40 = scalar_select %p37, %s38, %s39
    %p43 = pneg %p37
    %p44 = scmp.eq.s32.totalorder %s9, 1
    %p45 = por %p43, %p44
    %p46 = scmp.ne.s32.totalorder %s38, %s41
    %p47 = scmp.eq.s32.totalorder %s9, 0
    %p48 = por %p46, %p47
    %p49 = scmp.ne.s32.totalorder %s38, %s41
    %p50 = scmp.eq.s32.totalorder %s14, 1
    %p51 = por %p49, %p50
    %p52 = scmp.ne.s32.totalorder %s41, %s42
    %p53 = scmp.eq.s32.totalorder %s14, 0
    %p54 = por %p52, %p53
    %p55 = scmp.ne.s32.totalorder %s41, %s42
    %p56 = scmp.eq.s32.totalorder %s15, 1
    %p57 = por %p55, %p56
    %p59 = scmp.ne.s32.totalorder %s42, %s58
    %p60 = scmp.eq.s32.totalorder %s15, 0
    %p61 = por %p59, %p60
    %s62 = ssub.s32 %s18, %s27
    %p63 = scmp.eq.s32.totalorder %s62, 0
    %s65 = sadd.s32 %s64, 1
    %s66 = scalar_select %p63, %s64, %s65
    %p69 = pneg %p63
    %p70 = scmp.eq.s32.totalorder %s9, 1
    %p71 = por %p69, %p70
    %p72 = scmp.ne.s32.totalorder %s64, %s67
    %p73 = scmp.eq.s32.totalorder %s9, 0
    %p74 = por %p72, %p73
    %p75 = scmp.ne.s32.totalorder %s64, %s67
    %p76 = scmp.eq.s32.totalorder %s14, 1
    %p77 = por %p75, %p76
    %p78 = scmp.ne.s32.totalorder %s67, %s68
    %p79 = scmp.eq.s32.totalorder %s14, 0
    %p80 = por %p78, %p79
    %p81 = scmp.ne.s32.totalorder %s67, %s68
    %p82 = scmp.eq.s32.totalorder %s15, 1
    %p83 = por %p81, %p82
    %p85 = scmp.ne.s32.totalorder %s68, %s84
    %p86 = scmp.eq.s32.totalorder %s15, 0
    %p87 = por %p85, %p86
    %s88 = ssub.s32 %s18, %s27
    %p89 = scmp.eq.s32.totalorder %s88, 0
    %s91 = sadd.s32 %s90, 1
    %s92 = scalar_select %p89, %s90, %s91
    %p95 = pneg %p89
    %p96 = scmp.eq.s32.totalorder %s9, 1
    %p97 = por %p95, %p96
    %p98 = scmp.ne.s32.totalorder %s90, %s93
    %p99 = scmp.eq.s32.totalorder %s9, 0
    %p100 = por %p98, %p99
    %p101 = scmp.ne.s32.totalorder %s90, %s93
    %p102 = scmp.eq.s32.totalorder %s14, 1
    %p103 = por %p101, %p102
    %p104 = scmp.ne.s32.totalorder %s93, %s94
    %p105 = scmp.eq.s32.totalorder %s14, 0
    %p106 = por %p104, %p105
    %p107 = scmp.ne.s32.totalorder %s93, %s94
    %p108 = scmp.eq.s32.totalorder %s15, 1
    %p109 = por %p107, %p108
    %p111 = scmp.ne.s32.totalorder %s94, %s110
    %p112 = scmp.eq.s32.totalorder %s15, 0
    %p113 = por %p111, %p112
    %s114 = ssub.s32 %s16, %s35
    %s115 = ssub.s32 %s17, %s31
    %s116 = sor.u32 %s114, %s115
    %s117 = ssub.s32 %s18, %s27
    %s118 = sor.u32 %s116, %s117
    %p119 = scmp.eq.s32.totalorder %s118, 0
    %s121 = sadd.s32 %s120, 1
    %s122 = scalar_select %p119, %s120, %s121
    %p125 = pneg %p119
    %p126 = scmp.eq.s32.totalorder %s9, 1
    %p127 = por %p125, %p126
    %p128 = scmp.ne.s32.totalorder %s120, %s123
    %p129 = scmp.eq.s32.totalorder %s9, 0
    %p130 = por %p128, %p129
    %p131 = scmp.ne.s32.totalorder %s120, %s123
    %p132 = scmp.eq.s32.totalorder %s14, 1
    %p133 = por %p131, %p132
    %p134 = scmp.ne.s32.totalorder %s123, %s124
    %p135 = scmp.eq.s32.totalorder %s14, 0
    %p136 = por %p134, %p135
    %p137 = scmp.ne.s32.totalorder %s123, %s124
    %p138 = scmp.eq.s32.totalorder %s15, 1
    %p139 = por %p137, %p138
    %p141 = scmp.ne.s32.totalorder %s124, %s140
    %p142 = scmp.eq.s32.totalorder %s15, 0
    %p143 = por %p141, %p142
    %p144 = scmp.le.s32.totalorder 1, %s9
    %p145 = scmp.lt.s32.totalorder %s9, 3
    %p146 = pnand %p144, %p145
    %p147 = pneg %p146
    // Predicated region
    $region9: #{duc_forward.1} parent=5 // pred_check
      _
    $region10: #{duc_forward.1} parent=5 // pred_check_branch
      %149 = sbr.rel (%p146) target = $region12
    $region11: #{duc_forward.1} parent=5 // pred_region
      %s150 = ssub.s32 %s9, 1
      // Predicated region
      $region13: #{duc_forward.1} parent=11 // pred_check
        %p151 = pneg %p80
      $region14: #{duc_forward.1} parent=11 // pred_check_branch
        %153 = sbr.rel (%p151) target = $region16
      $region15: #{duc_forward.1} parent=11 // pred_region
        %p154 = scmp.lt.s32.totalorder %s21, 0
        %s155 = scalar_select %p154, %s21, 0
        %s156 = smul.addr %s155, 8
        %s157 = scalar_lea.vmem %s1, %s156
      $region16: #{duc_forward.1} parent=11 // pred_fallthru
        _
      // Predicated region
      $region17: #{duc_forward.1} parent=11 // pred_check
        %p158 = pneg %p106
      $region18: #{duc_forward.1} parent=11 // pred_check_branch
        %160 = sbr.rel (%p158) target = $region20
      $region19: #{duc_forward.1} parent=11 // pred_region
        %p161 = scmp.lt.s32.totalorder %s21, 0
        %s162 = scalar_select %p161, %s21, 0
        %s163 = scalar_lea.vmem %s2, %s162
      $region20: #{duc_forward.1} parent=11 // pred_fallthru
        _
    $region12: #{duc_forward.1} parent=5 // pred_fallthru
      _
    %p164 = scmp.lt.s32.totalorder %s9, 2
    // Predicated region
    $region21: #{duc_forward.1} parent=5 // pred_check
      %p165 = pneg %p164
    $region22: #{duc_forward.1} parent=5 // pred_check_branch
      %167 = sbr.rel (%p165) target = $region24
    $region23: #{duc_forward.1} parent=5 // pred_region
      // Predicated region
      $region25: #{duc_forward.1} parent=23 // pred_check
        %p168 = pneg %p48
      $region26: #{duc_forward.1} parent=23 // pred_check_branch
        %170 = sbr.rel (%p168) target = $region28
      $region27: #{duc_forward.1} parent=23 // pred_region
        %p171 = scmp.lt.s32.totalorder %s16, 1
        %s172 = scalar_select %p171, %s16, 1
        %s173 = smul.addr %s172, 54
        %s174 = smul.addr %s173, 8
        %s175 = scalar_lea.vmem %s0, %s174
      $region28: #{duc_forward.1} parent=23 // pred_fallthru
        _
    $region24: #{duc_forward.1} parent=5 // pred_fallthru
      _
    %p176 = scmp.le.s32.totalorder 1, %s9
    %p177 = scmp.lt.s32.totalorder %s9, 3
    %p178 = pnand %p176, %p177
    %p179 = pneg %p178
    // Predicated region
    $region29: #{duc_forward.1} parent=5 // pred_check
      _
    $region30: #{duc_forward.1} parent=5 // pred_check_branch
      %181 = sbr.rel (%p178) target = $region32
    $region31: #{duc_forward.1} parent=5 // pred_region
      %s182 = ssub.s32 %s9, 1
      %p183 = scmp.lt.s32.totalorder %s19, 1
      %s184 = scalar_select %p183, %s19, 1
      %s185 = smul.addr %s184, 54
      %s186 = smul.addr %s185, 8
      %s187 = scalar_lea.vmem %s0, %s186
      %p188 = pneg %p54
      %p189 = pneg %p51
      %p190 = scmp.lt.s32.totalorder %s21, 0
      %s191 = scalar_select %p190, %s21, 0
      %s192 = smul.addr %s191, 8
      %s193 = scalar_lea.vmem %s1, %s192
      %p194 = pneg %p80
      %p195 = pneg %p77
      %p196 = scmp.lt.s32.totalorder %s21, 0
      %s197 = scalar_select %p196, %s21, 0
      %s198 = scalar_lea.vmem %s2, %s197
      %p199 = pneg %p106
      %p200 = pneg %p103
      %p201 = pneg %p136
      %p202 = pneg %p133
      %s203 = smul.u32 32, %s20
      %p204 = scmp.lt.s32.totalorder %s19, 1
      %s205 = scalar_select %p204, %s19, 1
      %p206 = scmp.lt.s32.totalorder %s203, 31
      %s207 = scalar_select %p206, %s203, 31
      %p208 = scmp.lt.s32.totalorder %s21, 0
      %s209 = scalar_select %p208, %s21, 0
      %s210 = sadd.s32 %s209, %s207
      %s211 = smul.addr %s205, 32
      %s212 = sadd.s32 %s210, %s211
      %s213 = smul.addr %s212, 8
      %s214 = scalar_lea.vmem %s3, %s213
      %p215 = scmp.lt.s32.totalorder %s19, 1
      %s216 = scalar_select %p215, %s19, 1
      %s217 = smul.addr %s216, 54
      %s218 = smul.addr %s217, 8
      %s219 = scalar_lea.vmem %s0, %s218
      %p220 = scmp.lt.s32.totalorder %s21, 0
      %s221 = scalar_select %p220, %s21, 0
      %s222 = smul.addr %s221, 8
      %s223 = scalar_lea.vmem %s1, %s222
      %p224 = scmp.lt.s32.totalorder %s21, 0
      %s225 = scalar_select %p224, %s21, 0
      %s226 = scalar_lea.vmem %s2, %s225
      %s227 = smul.u32 32, %s20
      %p228 = scmp.lt.s32.totalorder %s19, 1
      %s229 = scalar_select %p228, %s19, 1
      %p230 = scmp.lt.s32.totalorder %s227, 31
      %s231 = scalar_select %p230, %s227, 31
      %p232 = scmp.lt.s32.totalorder %s21, 0
      %s233 = scalar_select %p232, %s21, 0
      %s234 = sadd.s32 %s233, %s231
      %s235 = smul.addr %s229, 32
      %s236 = sadd.s32 %s234, %s235
      %s237 = smul.addr %s236, 8
      %s238 = scalar_lea.vmem %s3, %s237
      %s239 = smul.u32 32, %s20
      %p240 = scmp.eq.s32.totalorder %s21, 0
      // Predicated region
      $region33: #{duc_forward.1} parent=31 // pred_check
        %p241 = pneg %p240
      $region34: #{duc_forward.1} parent=31 // pred_check_branch
        %243 = sbr.rel (%p241) target = $region36
      $region35: #{duc_forward.1} parent=31 // pred_region
        %s244 = smul.u32 %s20, 16
        %s245 = smul.u32 %s244, 24
        %s246 = scalar_lea.vmem %s219, %s245
        %v247 = vld [vmem:[%s246] sm:$0xff]
        %v248 = vld [vmem:[%s246 + $0x8] sm:$0xff]
        %v249 = vld [vmem:[%s246 + $0x18] sm:$0xff]
        %v250 = vld [vmem:[%s246 + $0x20] sm:$0xff]
        %v251 = vld [vmem:[%s246 + $0x30] sm:$0xff]
        %v252 = vld [vmem:[%s246 + $0x38] sm:$0xff]
        %v253 = vld [vmem:[%s246 + $0x48] sm:$0xff]
        %v254 = vld [vmem:[%s246 + $0x50] sm:$0xff]
        %v255 = vld [vmem:[%s246 + $0x60] sm:$0xff]
        %v256 = vld [vmem:[%s246 + $0x68] sm:$0xff]
        %v257 = vld [vmem:[%s246 + $0x78] sm:$0xff]
        %v258 = vld [vmem:[%s246 + $0x80] sm:$0xff]
        %v259 = vld [vmem:[%s246 + $0x90] sm:$0xff]
        %v260 = vld [vmem:[%s246 + $0x98] sm:$0xff]
        %v261 = vld [vmem:[%s246 + $0xa8] sm:$0xff]
        %v262 = vld [vmem:[%s246 + $0xb0] sm:$0xff]
        %v263 = vld [vmem:[%s246 + $0xc0] sm:$0xff]
        %v264 = vld [vmem:[%s246 + $0xc8] sm:$0xff]
        %v265 = vld [vmem:[%s246 + $0xd8] sm:$0xff]
        %v266 = vld [vmem:[%s246 + $0xe0] sm:$0xff]
        %v267 = vld [vmem:[%s246 + $0xf0] sm:$0xff]
        %v268 = vld [vmem:[%s246 + $0xf8] sm:$0xff]
        %v269 = vld [vmem:[%s246 + $0x108] sm:$0xff]
        %v270 = vld [vmem:[%s246 + $0x110] sm:$0xff]
        %v271 = vld [vmem:[%s246 + $0x120] sm:$0xff]
        %v272 = vld [vmem:[%s246 + $0x128] sm:$0xff]
        %v273 = vld [vmem:[%s246 + $0x138] sm:$0xff]
        %v274 = vld [vmem:[%s246 + $0x140] sm:$0xff]
        %v275 = vld [vmem:[%s246 + $0x150] sm:$0xff]
        %v276 = vld [vmem:[%s246 + $0x158] sm:$0xff]
        %v277 = vld [vmem:[%s246 + $0x168] sm:$0xff]
        %v278 = vld [vmem:[%s246 + $0x170] sm:$0xff]
        %vm279 = vcmask 31744
        %280 = vst.msk [vmem:[#allocation2] sm:$0xff] %vm279, %v247
        %281 = vst.msk [vmem:[#allocation2 + $0x8] sm:$0xff] %vm279, %v248
        %282 = vst.msk [vmem:[#allocation2 + $0x10] sm:$0xff] %vm279, %v249
        %283 = vst.msk [vmem:[#allocation2 + $0x18] sm:$0xff] %vm279, %v250
        %284 = vst.msk [vmem:[#allocation2 + $0x20] sm:$0xff] %vm279, %v251
        %285 = vst.msk [vmem:[#allocation2 + $0x28] sm:$0xff] %vm279, %v252
        %286 = vst.msk [vmem:[#allocation2 + $0x30] sm:$0xff] %vm279, %v253
        %287 = vst.msk [vmem:[#allocation2 + $0x38] sm:$0xff] %vm279, %v254
        %288 = vst.msk [vmem:[#allocation2 + $0x40] sm:$0xff] %vm279, %v255
        %289 = vst.msk [vmem:[#allocation2 + $0x48] sm:$0xff] %vm279, %v256
        %290 = vst.msk [vmem:[#allocation2 + $0x50] sm:$0xff] %vm279, %v257
        %291 = vst.msk [vmem:[#allocation2 + $0x58] sm:$0xff] %vm279, %v258
        %292 = vst.msk [vmem:[#allocation2 + $0x60] sm:$0xff] %vm279, %v259
        %293 = vst.msk [vmem:[#allocation2 + $0x68] sm:$0xff] %vm279, %v260
        %294 = vst.msk [vmem:[#allocation2 + $0x70] sm:$0xff] %vm279, %v261
        %295 = vst.msk [vmem:[#allocation2 + $0x78] sm:$0xff] %vm279, %v262
        %296 = vst.msk [vmem:[#allocation2 + $0x80] sm:$0xff] %vm279, %v263
        %297 = vst.msk [vmem:[#allocation2 + $0x88] sm:$0xff] %vm279, %v264
        %298 = vst.msk [vmem:[#allocation2 + $0x90] sm:$0xff] %vm279, %v265
        %299 = vst.msk [vmem:[#allocation2 + $0x98] sm:$0xff] %vm279, %v266
        %300 = vst.msk [vmem:[#allocation2 + $0xa0] sm:$0xff] %vm279, %v267
        %301 = vst.msk [vmem:[#allocation2 + $0xa8] sm:$0xff] %vm279, %v268
        %302 = vst.msk [vmem:[#allocation2 + $0xb0] sm:$0xff] %vm279, %v269
        %303 = vst.msk [vmem:[#allocation2 + $0xb8] sm:$0xff] %vm279, %v270
        %304 = vst.msk [vmem:[#allocation2 + $0xc0] sm:$0xff] %vm279, %v271
        %305 = vst.msk [vmem:[#allocation2 + $0xc8] sm:$0xff] %vm279, %v272
        %306 = vst.msk [vmem:[#allocation2 + $0xd0] sm:$0xff] %vm279, %v273
        %307 = vst.msk [vmem:[#allocation2 + $0xd8] sm:$0xff] %vm279, %v274
        %308 = vst.msk [vmem:[#allocation2 + $0xe0] sm:$0xff] %vm279, %v275
        %309 = vst.msk [vmem:[#allocation2 + $0xe8] sm:$0xff] %vm279, %v276
        %310 = vst.msk [vmem:[#allocation2 + $0xf0] sm:$0xff] %vm279, %v277
        %311 = vst.msk [vmem:[#allocation2 + $0xf8] sm:$0xff] %vm279, %v278
        %v312 = vld [vmem:[%s246 + $0x1] sm:$0xff]
        %v313 = vld [vmem:[%s246 + $0x9] sm:$0xff]
        %v314 = vld [vmem:[%s246 + $0x19] sm:$0xff]
        %v315 = vld [vmem:[%s246 + $0x21] sm:$0xff]
        %v316 = vld [vmem:[%s246 + $0x31] sm:$0xff]
        %v317 = vld [vmem:[%s246 + $0x39] sm:$0xff]
        %v318 = vld [vmem:[%s246 + $0x49] sm:$0xff]
        %v319 = vld [vmem:[%s246 + $0x51] sm:$0xff]
        %v320 = vld [vmem:[%s246 + $0x61] sm:$0xff]
        %v321 = vld [vmem:[%s246 + $0x69] sm:$0xff]
        %v322 = vld [vmem:[%s246 + $0x79] sm:$0xff]
        %v323 = vld [vmem:[%s246 + $0x81] sm:$0xff]
        %v324 = vld [vmem:[%s246 + $0x91] sm:$0xff]
        %v325 = vld [vmem:[%s246 + $0x99] sm:$0xff]
        %v326 = vld [vmem:[%s246 + $0xa9] sm:$0xff]
        %v327 = vld [vmem:[%s246 + $0xb1] sm:$0xff]
        %v328 = vld [vmem:[%s246 + $0xc1] sm:$0xff]
        %v329 = vld [vmem:[%s246 + $0xc9] sm:$0xff]
        %v330 = vld [vmem:[%s246 + $0xd9] sm:$0xff]
        %v331 = vld [vmem:[%s246 + $0xe1] sm:$0xff]
        %v332 = vld [vmem:[%s246 + $0xf1] sm:$0xff]
        %v333 = vld [vmem:[%s246 + $0xf9] sm:$0xff]
        %v334 = vld [vmem:[%s246 + $0x109] sm:$0xff]
        %v335 = vld [vmem:[%s246 + $0x111] sm:$0xff]
        %v336 = vld [vmem:[%s246 + $0x121] sm:$0xff]
        %v337 = vld [vmem:[%s246 + $0x129] sm:$0xff]
        %v338 = vld [vmem:[%s246 + $0x139] sm:$0xff]
        %v339 = vld [vmem:[%s246 + $0x141] sm:$0xff]
        %v340 = vld [vmem:[%s246 + $0x151] sm:$0xff]
        %v341 = vld [vmem:[%s246 + $0x159] sm:$0xff]
        %v342 = vld [vmem:[%s246 + $0x169] sm:$0xff]
        %v343 = vld [vmem:[%s246 + $0x171] sm:$0xff]
        %376 = vrot.lane.b32.xlu0 %v312, 4
        %v377 = vpop.permute.xlu0 %376
        %378 = vrot.lane.b32.xlu0 %v313, 4
        %v379 = vpop.permute.xlu0 %378
        %380 = vrot.lane.b32.xlu0 %v314, 4
        %v381 = vpop.permute.xlu0 %380
        %382 = vrot.lane.b32.xlu0 %v315, 4
        %v383 = vpop.permute.xlu0 %382
        %384 = vrot.lane.b32.xlu0 %v316, 4
        %v385 = vpop.permute.xlu0 %384
        %386 = vrot.lane.b32.xlu0 %v317, 4
        %v387 = vpop.permute.xlu0 %386
        %388 = vrot.lane.b32.xlu0 %v318, 4
        %v389 = vpop.permute.xlu0 %388
        %390 = vrot.lane.b32.xlu0 %v319, 4
        %v391 = vpop.permute.xlu0 %390
        %392 = vrot.lane.b32.xlu0 %v320, 4
        %v393 = vpop.permute.xlu0 %392
        %394 = vrot.lane.b32.xlu0 %v321, 4
        %v395 = vpop.permute.xlu0 %394
        %396 = vrot.lane.b32.xlu0 %v322, 4
        %v397 = vpop.permute.xlu0 %396
        %398 = vrot.lane.b32.xlu0 %v323, 4
        %v399 = vpop.permute.xlu0 %398
        %400 = vrot.lane.b32.xlu0 %v324, 4
        %v401 = vpop.permute.xlu0 %400
        %402 = vrot.lane.b32.xlu0 %v325, 4
        %v403 = vpop.permute.xlu0 %402
        %404 = vrot.lane.b32.xlu0 %v326, 4
        %v405 = vpop.permute.xlu0 %404
        %406 = vrot.lane.b32.xlu0 %v327, 4
        %v407 = vpop.permute.xlu0 %406
        %408 = vrot.lane.b32.xlu0 %v328, 4
        %v409 = vpop.permute.xlu0 %408
        %410 = vrot.lane.b32.xlu0 %v329, 4
        %v411 = vpop.permute.xlu0 %410
        %412 = vrot.lane.b32.xlu0 %v330, 4
        %v413 = vpop.permute.xlu0 %412
        %414 = vrot.lane.b32.xlu0 %v331, 4
        %v415 = vpop.permute.xlu0 %414
        %416 = vrot.lane.b32.xlu0 %v332, 4
        %v417 = vpop.permute.xlu0 %416
        %418 = vrot.lane.b32.xlu0 %v333, 4
        %v419 = vpop.permute.xlu0 %418
        %420 = vrot.lane.b32.xlu0 %v334, 4
        %v421 = vpop.permute.xlu0 %420
        %422 = vrot.lane.b32.xlu0 %v335, 4
        %v423 = vpop.permute.xlu0 %422
        %424 = vrot.lane.b32.xlu0 %v336, 4
        %v425 = vpop.permute.xlu0 %424
        %426 = vrot.lane.b32.xlu0 %v337, 4
        %v427 = vpop.permute.xlu0 %426
        %428 = vrot.lane.b32.xlu0 %v338, 4
        %v429 = vpop.permute.xlu0 %428
        %430 = vrot.lane.b32.xlu0 %v339, 4
        %v431 = vpop.permute.xlu0 %430
        %432 = vrot.lane.b32.xlu0 %v340, 4
        %v433 = vpop.permute.xlu0 %432
        %434 = vrot.lane.b32.xlu0 %v341, 4
        %v435 = vpop.permute.xlu0 %434
        %436 = vrot.lane.b32.xlu0 %v342, 4
        %v437 = vpop.permute.xlu0 %436
        %438 = vrot.lane.b32.xlu0 %v343, 4
        %v439 = vpop.permute.xlu0 %438
        %vm472 = vcmask 64544
        %473 = vst.msk [vmem:[#allocation2] sm:$0xff] %vm472, %v377
        %474 = vst.msk [vmem:[#allocation2 + $0x8] sm:$0xff] %vm472, %v379
        %475 = vst.msk [vmem:[#allocation2 + $0x10] sm:$0xff] %vm472, %v381
        %476 = vst.msk [vmem:[#allocation2 + $0x18] sm:$0xff] %vm472, %v383
        %477 = vst.msk [vmem:[#allocation2 + $0x20] sm:$0xff] %vm472, %v385
        %478 = vst.msk [vmem:[#allocation2 + $0x28] sm:$0xff] %vm472, %v387
        %479 = vst.msk [vmem:[#allocation2 + $0x30] sm:$0xff] %vm472, %v389
        %480 = vst.msk [vmem:[#allocation2 + $0x38] sm:$0xff] %vm472, %v391
        %481 = vst.msk [vmem:[#allocation2 + $0x40] sm:$0xff] %vm472, %v393
        %482 = vst.msk [vmem:[#allocation2 + $0x48] sm:$0xff] %vm472, %v395
        %483 = vst.msk [vmem:[#allocation2 + $0x50] sm:$0xff] %vm472, %v397
        %484 = vst.msk [vmem:[#allocation2 + $0x58] sm:$0xff] %vm472, %v399
        %485 = vst.msk [vmem:[#allocation2 + $0x60] sm:$0xff] %vm472, %v401
        %486 = vst.msk [vmem:[#allocation2 + $0x68] sm:$0xff] %vm472, %v403
        %487 = vst.msk [vmem:[#allocation2 + $0x70] sm:$0xff] %vm472, %v405
        %488 = vst.msk [vmem:[#allocation2 + $0x78] sm:$0xff] %vm472, %v407
        %489 = vst.msk [vmem:[#allocation2 + $0x80] sm:$0xff] %vm472, %v409
        %490 = vst.msk [vmem:[#allocation2 + $0x88] sm:$0xff] %vm472, %v411
        %491 = vst.msk [vmem:[#allocation2 + $0x90] sm:$0xff] %vm472, %v413
        %492 = vst.msk [vmem:[#allocation2 + $0x98] sm:$0xff] %vm472, %v415
        %493 = vst.msk [vmem:[#allocation2 + $0xa0] sm:$0xff] %vm472, %v417
        %494 = vst.msk [vmem:[#allocation2 + $0xa8] sm:$0xff] %vm472, %v419
        %495 = vst.msk [vmem:[#allocation2 + $0xb0] sm:$0xff] %vm472, %v421
        %496 = vst.msk [vmem:[#allocation2 + $0xb8] sm:$0xff] %vm472, %v423
        %497 = vst.msk [vmem:[#allocation2 + $0xc0] sm:$0xff] %vm472, %v425
        %498 = vst.msk [vmem:[#allocation2 + $0xc8] sm:$0xff] %vm472, %v427
        %499 = vst.msk [vmem:[#allocation2 + $0xd0] sm:$0xff] %vm472, %v429
        %500 = vst.msk [vmem:[#allocation2 + $0xd8] sm:$0xff] %vm472, %v431
        %501 = vst.msk [vmem:[#allocation2 + $0xe0] sm:$0xff] %vm472, %v433
        %502 = vst.msk [vmem:[#allocation2 + $0xe8] sm:$0xff] %vm472, %v435
        %503 = vst.msk [vmem:[#allocation2 + $0xf0] sm:$0xff] %vm472, %v437
        %504 = vst.msk [vmem:[#allocation2 + $0xf8] sm:$0xff] %vm472, %v439
        %v505 = vld [vmem:[%s246 + $0x2] sm:$0xff]
        %v506 = vld [vmem:[%s246 + $0xa] sm:$0xff]
        %v507 = vld [vmem:[%s246 + $0x1a] sm:$0xff]
        %v508 = vld [vmem:[%s246 + $0x22] sm:$0xff]
        %v509 = vld [vmem:[%s246 + $0x32] sm:$0xff]
        %v510 = vld [vmem:[%s246 + $0x3a] sm:$0xff]
        %v511 = vld [vmem:[%s246 + $0x4a] sm:$0xff]
        %v512 = vld [vmem:[%s246 + $0x52] sm:$0xff]
        %v513 = vld [vmem:[%s246 + $0x62] sm:$0xff]
        %v514 = vld [vmem:[%s246 + $0x6a] sm:$0xff]
        %v515 = vld [vmem:[%s246 + $0x7a] sm:$0xff]
        %v516 = vld [vmem:[%s246 + $0x82] sm:$0xff]
        %v517 = vld [vmem:[%s246 + $0x92] sm:$0xff]
        %v518 = vld [vmem:[%s246 + $0x9a] sm:$0xff]
        %v519 = vld [vmem:[%s246 + $0xaa] sm:$0xff]
        %v520 = vld [vmem:[%s246 + $0xb2] sm:$0xff]
        %v521 = vld [vmem:[%s246 + $0xc2] sm:$0xff]
        %v522 = vld [vmem:[%s246 + $0xca] sm:$0xff]
        %v523 = vld [vmem:[%s246 + $0xda] sm:$0xff]
        %v524 = vld [vmem:[%s246 + $0xe2] sm:$0xff]
        %v525 = vld [vmem:[%s246 + $0xf2] sm:$0xff]
        %v526 = vld [vmem:[%s246 + $0xfa] sm:$0xff]
        %v527 = vld [vmem:[%s246 + $0x10a] sm:$0xff]
        %v528 = vld [vmem:[%s246 + $0x112] sm:$0xff]
        %v529 = vld [vmem:[%s246 + $0x122] sm:$0xff]
        %v530 = vld [vmem:[%s246 + $0x12a] sm:$0xff]
        %v531 = vld [vmem:[%s246 + $0x13a] sm:$0xff]
        %v532 = vld [vmem:[%s246 + $0x142] sm:$0xff]
        %v533 = vld [vmem:[%s246 + $0x152] sm:$0xff]
        %v534 = vld [vmem:[%s246 + $0x15a] sm:$0xff]
        %v535 = vld [vmem:[%s246 + $0x16a] sm:$0xff]
        %v536 = vld [vmem:[%s246 + $0x172] sm:$0xff]
        %569 = vrot.lane.b32.xlu0 %v505, 8
        %v570 = vpop.permute.xlu0 %569
        %571 = vrot.lane.b32.xlu0 %v506, 8
        %v572 = vpop.permute.xlu0 %571
        %573 = vrot.lane.b32.xlu0 %v507, 8
        %v574 = vpop.permute.xlu0 %573
        %575 = vrot.lane.b32.xlu0 %v508, 8
        %v576 = vpop.permute.xlu0 %575
        %577 = vrot.lane.b32.xlu0 %v509, 8
        %v578 = vpop.permute.xlu0 %577
        %579 = vrot.lane.b32.xlu0 %v510, 8
        %v580 = vpop.permute.xlu0 %579
        %581 = vrot.lane.b32.xlu0 %v511, 8
        %v582 = vpop.permute.xlu0 %581
        %583 = vrot.lane.b32.xlu0 %v512, 8
        %v584 = vpop.permute.xlu0 %583
        %585 = vrot.lane.b32.xlu0 %v513, 8
        %v586 = vpop.permute.xlu0 %585
        %587 = vrot.lane.b32.xlu0 %v514, 8
        %v588 = vpop.permute.xlu0 %587
        %589 = vrot.lane.b32.xlu0 %v515, 8
        %v590 = vpop.permute.xlu0 %589
        %591 = vrot.lane.b32.xlu0 %v516, 8
        %v592 = vpop.permute.xlu0 %591
        %593 = vrot.lane.b32.xlu0 %v517, 8
        %v594 = vpop.permute.xlu0 %593
        %595 = vrot.lane.b32.xlu0 %v518, 8
        %v596 = vpop.permute.xlu0 %595
        %597 = vrot.lane.b32.xlu0 %v519, 8
        %v598 = vpop.permute.xlu0 %597
        %599 = vrot.lane.b32.xlu0 %v520, 8
        %v600 = vpop.permute.xlu0 %599
        %601 = vrot.lane.b32.xlu0 %v521, 8
        %v602 = vpop.permute.xlu0 %601
        %603 = vrot.lane.b32.xlu0 %v522, 8
        %v604 = vpop.permute.xlu0 %603
        %605 = vrot.lane.b32.xlu0 %v523, 8
        %v606 = vpop.permute.xlu0 %605
        %607 = vrot.lane.b32.xlu0 %v524, 8
        %v608 = vpop.permute.xlu0 %607
        %609 = vrot.lane.b32.xlu0 %v525, 8
        %v610 = vpop.permute.xlu0 %609
        %611 = vrot.lane.b32.xlu0 %v526, 8
        %v612 = vpop.permute.xlu0 %611
        %613 = vrot.lane.b32.xlu0 %v527, 8
        %v614 = vpop.permute.xlu0 %613
        %615 = vrot.lane.b32.xlu0 %v528, 8
        %v616 = vpop.permute.xlu0 %615
        %617 = vrot.lane.b32.xlu0 %v529, 8
        %v618 = vpop.permute.xlu0 %617
        %619 = vrot.lane.b32.xlu0 %v530, 8
        %v620 = vpop.permute.xlu0 %619
        %621 = vrot.lane.b32.xlu0 %v531, 8
        %v622 = vpop.permute.xlu0 %621
        %623 = vrot.lane.b32.xlu0 %v532, 8
        %v624 = vpop.permute.xlu0 %623
        %625 = vrot.lane.b32.xlu0 %v533, 8
        %v626 = vpop.permute.xlu0 %625
        %627 = vrot.lane.b32.xlu0 %v534, 8
        %v628 = vpop.permute.xlu0 %627
        %629 = vrot.lane.b32.xlu0 %v535, 8
        %v630 = vpop.permute.xlu0 %629
        %631 = vrot.lane.b32.xlu0 %v536, 8
        %v632 = vpop.permute.xlu0 %631
        %vm665 = vcmask 97344
        %666 = vst.msk [vmem:[#allocation2] sm:$0xff] %vm665, %v570
        %667 = vst.msk [vmem:[#allocation2 + $0x8] sm:$0xff] %vm665, %v572
        %668 = vst.msk [vmem:[#allocation2 + $0x10] sm:$0xff] %vm665, %v574
        %669 = vst.msk [vmem:[#allocation2 + $0x18] sm:$0xff] %vm665, %v576
        %670 = vst.msk [vmem:[#allocation2 + $0x20] sm:$0xff] %vm665, %v578
        %671 = vst.msk [vmem:[#allocation2 + $0x28] sm:$0xff] %vm665, %v580
        %672 = vst.msk [vmem:[#allocation2 + $0x30] sm:$0xff] %vm665, %v582
        %673 = vst.msk [vmem:[#allocation2 + $0x38] sm:$0xff] %vm665, %v584
        %674 = vst.msk [vmem:[#allocation2 + $0x40] sm:$0xff] %vm665, %v586
        %675 = vst.msk [vmem:[#allocation2 + $0x48] sm:$0xff] %vm665, %v588
        %676 = vst.msk [vmem:[#allocation2 + $0x50] sm:$0xff] %vm665, %v590
        %677 = vst.msk [vmem:[#allocation2 + $0x58] sm:$0xff] %vm665, %v592
        %678 = vst.msk [vmem:[#allocation2 + $0x60] sm:$0xff] %vm665, %v594
        %679 = vst.msk [vmem:[#allocation2 + $0x68] sm:$0xff] %vm665, %v596
        %680 = vst.msk [vmem:[#allocation2 + $0x70] sm:$0xff] %vm665, %v598
        %681 = vst.msk [vmem:[#allocation2 + $0x78] sm:$0xff] %vm665, %v600
        %682 = vst.msk [vmem:[#allocation2 + $0x80] sm:$0xff] %vm665, %v602
        %683 = vst.msk [vmem:[#allocation2 + $0x88] sm:$0xff] %vm665, %v604
        %684 = vst.msk [vmem:[#allocation2 + $0x90] sm:$0xff] %vm665, %v606
        %685 = vst.msk [vmem:[#allocation2 + $0x98] sm:$0xff] %vm665, %v608
        %686 = vst.msk [vmem:[#allocation2 + $0xa0] sm:$0xff] %vm665, %v610
        %687 = vst.msk [vmem:[#allocation2 + $0xa8] sm:$0xff] %vm665, %v612
        %688 = vst.msk [vmem:[#allocation2 + $0xb0] sm:$0xff] %vm665, %v614
        %689 = vst.msk [vmem:[#allocation2 + $0xb8] sm:$0xff] %vm665, %v616
        %690 = vst.msk [vmem:[#allocation2 + $0xc0] sm:$0xff] %vm665, %v618
        %691 = vst.msk [vmem:[#allocation2 + $0xc8] sm:$0xff] %vm665, %v620
        %692 = vst.msk [vmem:[#allocation2 + $0xd0] sm:$0xff] %vm665, %v622
        %693 = vst.msk [vmem:[#allocation2 + $0xd8] sm:$0xff] %vm665, %v624
        %694 = vst.msk [vmem:[#allocation2 + $0xe0] sm:$0xff] %vm665, %v626
        %695 = vst.msk [vmem:[#allocation2 + $0xe8] sm:$0xff] %vm665, %v628
        %696 = vst.msk [vmem:[#allocation2 + $0xf0] sm:$0xff] %vm665, %v630
        %697 = vst.msk [vmem:[#allocation2 + $0xf8] sm:$0xff] %vm665, %v632
        %s698 = sadd.s32 %s244, 1
        %s699 = smul.u32 %s698, 24
        %s700 = scalar_lea.vmem %s219, %s699
        %v701 = vld [vmem:[%s700] sm:$0xff]
        %v702 = vld [vmem:[%s700 + $0x8] sm:$0xff]
        %v703 = vld [vmem:[%s700 + $0x18] sm:$0xff]
        %v704 = vld [vmem:[%s700 + $0x20] sm:$0xff]
        %v705 = vld [vmem:[%s700 + $0x30] sm:$0xff]
        %v706 = vld [vmem:[%s700 + $0x38] sm:$0xff]
        %v707 = vld [vmem:[%s700 + $0x48] sm:$0xff]
        %v708 = vld [vmem:[%s700 + $0x50] sm:$0xff]
        %v709 = vld [vmem:[%s700 + $0x60] sm:$0xff]
        %v710 = vld [vmem:[%s700 + $0x68] sm:$0xff]
        %v711 = vld [vmem:[%s700 + $0x78] sm:$0xff]
        %v712 = vld [vmem:[%s700 + $0x80] sm:$0xff]
        %v713 = vld [vmem:[%s700 + $0x90] sm:$0xff]
        %v714 = vld [vmem:[%s700 + $0x98] sm:$0xff]
        %v715 = vld [vmem:[%s700 + $0xa8] sm:$0xff]
        %v716 = vld [vmem:[%s700 + $0xb0] sm:$0xff]
        %v717 = vld [vmem:[%s700 + $0xc0] sm:$0xff]
        %v718 = vld [vmem:[%s700 + $0xc8] sm:$0xff]
        %v719 = vld [vmem:[%s700 + $0xd8] sm:$0xff]
        %v720 = vld [vmem:[%s700 + $0xe0] sm:$0xff]
        %v721 = vld [vmem:[%s700 + $0xf0] sm:$0xff]
        %v722 = vld [vmem:[%s700 + $0xf8] sm:$0xff]
        %v723 = vld [vmem:[%s700 + $0x108] sm:$0xff]
        %v724 = vld [vmem:[%s700 + $0x110] sm:$0xff]
        %v725 = vld [vmem:[%s700 + $0x120] sm:$0xff]
        %v726 = vld [vmem:[%s700 + $0x128] sm:$0xff]
        %v727 = vld [vmem:[%s700 + $0x138] sm:$0xff]
        %v728 = vld [vmem:[%s700 + $0x140] sm:$0xff]
        %v729 = vld [vmem:[%s700 + $0x150] sm:$0xff]
        %v730 = vld [vmem:[%s700 + $0x158] sm:$0xff]
        %v731 = vld [vmem:[%s700 + $0x168] sm:$0xff]
        %v732 = vld [vmem:[%s700 + $0x170] sm:$0xff]
        %765 = vrot.lane.b32.xlu0 %v701, 12
        %v766 = vpop.permute.xlu0 %765
        %767 = vrot.lane.b32.xlu0 %v702, 12
        %v768 = vpop.permute.xlu0 %767
        %769 = vrot.lane.b32.xlu0 %v703, 12
        %v770 = vpop.permute.xlu0 %769
        %771 = vrot.lane.b32.xlu0 %v704, 12
        %v772 = vpop.permute.xlu0 %771
        %773 = vrot.lane.b32.xlu0 %v705, 12
        %v774 = vpop.permute.xlu0 %773
        %775 = vrot.lane.b32.xlu0 %v706, 12
        %v776 = vpop.permute.xlu0 %775
        %777 = vrot.lane.b32.xlu0 %v707, 12
        %v778 = vpop.permute.xlu0 %777
        %779 = vrot.lane.b32.xlu0 %v708, 12
        %v780 = vpop.permute.xlu0 %779
        %781 = vrot.lane.b32.xlu0 %v709, 12
        %v782 = vpop.permute.xlu0 %781
        %783 = vrot.lane.b32.xlu0 %v710, 12
        %v784 = vpop.permute.xlu0 %783
        %785 = vrot.lane.b32.xlu0 %v711, 12
        %v786 = vpop.permute.xlu0 %785
        %787 = vrot.lane.b32.xlu0 %v712, 12
        %v788 = vpop.permute.xlu0 %787
        %789 = vrot.lane.b32.xlu0 %v713, 12
        %v790 = vpop.permute.xlu0 %789
        %791 = vrot.lane.b32.xlu0 %v714, 12
        %v792 = vpop.permute.xlu0 %791
        %793 = vrot.lane.b32.xlu0 %v715, 12
        %v794 = vpop.permute.xlu0 %793
        %795 = vrot.lane.b32.xlu0 %v716, 12
        %v796 = vpop.permute.xlu0 %795
        %797 = vrot.lane.b32.xlu0 %v717, 12
        %v798 = vpop.permute.xlu0 %797
        %799 = vrot.lane.b32.xlu0 %v718, 12
        %v800 = vpop.permute.xlu0 %799
        %801 = vrot.lane.b32.xlu0 %v719, 12
        %v802 = vpop.permute.xlu0 %801
        %803 = vrot.lane.b32.xlu0 %v720, 12
        %v804 = vpop.permute.xlu0 %803
        %805 = vrot.lane.b32.xlu0 %v721, 12
        %v806 = vpop.permute.xlu0 %805
        %807 = vrot.lane.b32.xlu0 %v722, 12
        %v808 = vpop.permute.xlu0 %807
        %809 = vrot.lane.b32.xlu0 %v723, 12
        %v810 = vpop.permute.xlu0 %809
        %811 = vrot.lane.b32.xlu0 %v724, 12
        %v812 = vpop.permute.xlu0 %811
        %813 = vrot.lane.b32.xlu0 %v725, 12
        %v814 = vpop.permute.xlu0 %813
        %815 = vrot.lane.b32.xlu0 %v726, 12
        %v816 = vpop.permute.xlu0 %815
        %817 = vrot.lane.b32.xlu0 %v727, 12
        %v818 = vpop.permute.xlu0 %817
        %819 = vrot.lane.b32.xlu0 %v728, 12
        %v820 = vpop.permute.xlu0 %819
        %821 = vrot.lane.b32.xlu0 %v729, 12
        %v822 = vpop.permute.xlu0 %821
        %823 = vrot.lane.b32.xlu0 %v730, 12
        %v824 = vpop.permute.xlu0 %823
        %825 = vrot.lane.b32.xlu0 %v731, 12
        %v826 = vpop.permute.xlu0 %825
        %827 = vrot.lane.b32.xlu0 %v732, 12
        %v828 = vpop.permute.xlu0 %827
        %vm861 = vcmask 130144
        %862 = vst.msk [vmem:[#allocation2] sm:$0xff] %vm861, %v766
        %863 = vst.msk [vmem:[#allocation2 + $0x8] sm:$0xff] %vm861, %v768
        %864 = vst.msk [vmem:[#allocation2 + $0x10] sm:$0xff] %vm861, %v770
        %865 = vst.msk [vmem:[#allocation2 + $0x18] sm:$0xff] %vm861, %v772
        %866 = vst.msk [vmem:[#allocation2 + $0x20] sm:$0xff] %vm861, %v774
        %867 = vst.msk [vmem:[#allocation2 + $0x28] sm:$0xff] %vm861, %v776
        %868 = vst.msk [vmem:[#allocation2 + $0x30] sm:$0xff] %vm861, %v778
        %869 = vst.msk [vmem:[#allocation2 + $0x38] sm:$0xff] %vm861, %v780
        %870 = vst.msk [vmem:[#allocation2 + $0x40] sm:$0xff] %vm861, %v782
        %871 = vst.msk [vmem:[#allocation2 + $0x48] sm:$0xff] %vm861, %v784
        %872 = vst.msk [vmem:[#allocation2 + $0x50] sm:$0xff] %vm861, %v786
        %873 = vst.msk [vmem:[#allocation2 + $0x58] sm:$0xff] %vm861, %v788
        %874 = vst.msk [vmem:[#allocation2 + $0x60] sm:$0xff] %vm861, %v790
        %875 = vst.msk [vmem:[#allocation2 + $0x68] sm:$0xff] %vm861, %v792
        %876 = vst.msk [vmem:[#allocation2 + $0x70] sm:$0xff] %vm861, %v794
        %877 = vst.msk [vmem:[#allocation2 + $0x78] sm:$0xff] %vm861, %v796
        %878 = vst.msk [vmem:[#allocation2 + $0x80] sm:$0xff] %vm861, %v798
        %879 = vst.msk [vmem:[#allocation2 + $0x88] sm:$0xff] %vm861, %v800
        %880 = vst.msk [vmem:[#allocation2 + $0x90] sm:$0xff] %vm861, %v802
        %881 = vst.msk [vmem:[#allocation2 + $0x98] sm:$0xff] %vm861, %v804
        %882 = vst.msk [vmem:[#allocation2 + $0xa0] sm:$0xff] %vm861, %v806
        %883 = vst.msk [vmem:[#allocation2 + $0xa8] sm:$0xff] %vm861, %v808
        %884 = vst.msk [vmem:[#allocation2 + $0xb0] sm:$0xff] %vm861, %v810
        %885 = vst.msk [vmem:[#allocation2 + $0xb8] sm:$0xff] %vm861, %v812
        %886 = vst.msk [vmem:[#allocation2 + $0xc0] sm:$0xff] %vm861, %v814
        %887 = vst.msk [vmem:[#allocation2 + $0xc8] sm:$0xff] %vm861, %v816
        %888 = vst.msk [vmem:[#allocation2 + $0xd0] sm:$0xff] %vm861, %v818
        %889 = vst.msk [vmem:[#allocation2 + $0xd8] sm:$0xff] %vm861, %v820
        %890 = vst.msk [vmem:[#allocation2 + $0xe0] sm:$0xff] %vm861, %v822
        %891 = vst.msk [vmem:[#allocation2 + $0xe8] sm:$0xff] %vm861, %v824
        %892 = vst.msk [vmem:[#allocation2 + $0xf0] sm:$0xff] %vm861, %v826
        %893 = vst.msk [vmem:[#allocation2 + $0xf8] sm:$0xff] %vm861, %v828
        %v894 = vld [vmem:[%s700 + $0x1] sm:$0xff]
        %v895 = vld [vmem:[%s700 + $0x9] sm:$0xff]
        %v896 = vld [vmem:[%s700 + $0x19] sm:$0xff]
        %v897 = vld [vmem:[%s700 + $0x21] sm:$0xff]
        %v898 = vld [vmem:[%s700 + $0x31] sm:$0xff]
        %v899 = vld [vmem:[%s700 + $0x39] sm:$0xff]
        %v900 = vld [vmem:[%s700 + $0x49] sm:$0xff]
        %v901 = vld [vmem:[%s700 + $0x51] sm:$0xff]
        %v902 = vld [vmem:[%s700 + $0x61] sm:$0xff]
        %v903 = vld [vmem:[%s700 + $0x69] sm:$0xff]
        %v904 = vld [vmem:[%s700 + $0x79] sm:$0xff]
        %v905 = vld [vmem:[%s700 + $0x81] sm:$0xff]
        %v906 = vld [vmem:[%s700 + $0x91] sm:$0xff]
        %v907 = vld [vmem:[%s700 + $0x99] sm:$0xff]
        %v908 = vld [vmem:[%s700 + $0xa9] sm:$0xff]
        %v909 = vld [vmem:[%s700 + $0xb1] sm:$0xff]
        %v910 = vld [vmem:[%s700 + $0xc1] sm:$0xff]
        %v911 = vld [vmem:[%s700 + $0xc9] sm:$0xff]
        %v912 = vld [vmem:[%s700 + $0xd9] sm:$0xff]
        %v913 = vld [vmem:[%s700 + $0xe1] sm:$0xff]
        %v914 = vld [vmem:[%s700 + $0xf1] sm:$0xff]
        %v915 = vld [vmem:[%s700 + $0xf9] sm:$0xff]
        %v916 = vld [vmem:[%s700 + $0x109] sm:$0xff]
        %v917 = vld [vmem:[%s700 + $0x111] sm:$0xff]
        %v918 = vld [vmem:[%s700 + $0x121] sm:$0xff]
        %v919 = vld [vmem:[%s700 + $0x129] sm:$0xff]
        %v920 = vld [vmem:[%s700 + $0x139] sm:$0xff]
        %v921 = vld [vmem:[%s700 + $0x141] sm:$0xff]
        %v922 = vld [vmem:[%s700 + $0x151] sm:$0xff]
        %v923 = vld [vmem:[%s700 + $0x159] sm:$0xff]
        %v924 = vld [vmem:[%s700 + $0x169] sm:$0xff]
        %v925 = vld [vmem:[%s700 + $0x171] sm:$0xff]
        %958 = vrot.lane.b32.xlu0 %v894, 16
        %v959 = vpop.permute.xlu0 %958
        %960 = vrot.lane.b32.xlu0 %v895, 16
        %v961 = vpop.permute.xlu0 %960
        %962 = vrot.lane.b32.xlu0 %v896, 16
        %v963 = vpop.permute.xlu0 %962
        %964 = vrot.lane.b32.xlu0 %v897, 16
        %v965 = vpop.permute.xlu0 %964
        %966 = vrot.lane.b32.xlu0 %v898, 16
        %v967 = vpop.permute.xlu0 %966
        %968 = vrot.lane.b32.xlu0 %v899, 16
        %v969 = vpop.permute.xlu0 %968
        %970 = vrot.lane.b32.xlu0 %v900, 16
        %v971 = vpop.permute.xlu0 %970
        %972 = vrot.lane.b32.xlu0 %v901, 16
        %v973 = vpop.permute.xlu0 %972
        %974 = vrot.lane.b32.xlu0 %v902, 16
        %v975 = vpop.permute.xlu0 %974
        %976 = vrot.lane.b32.xlu0 %v903, 16
        %v977 = vpop.permute.xlu0 %976
        %978 = vrot.lane.b32.xlu0 %v904, 16
        %v979 = vpop.permute.xlu0 %978
        %980 = vrot.lane.b32.xlu0 %v905, 16
        %v981 = vpop.permute.xlu0 %980
        %982 = vrot.lane.b32.xlu0 %v906, 16
        %v983 = vpop.permute.xlu0 %982
        %984 = vrot.lane.b32.xlu0 %v907, 16
        %v985 = vpop.permute.xlu0 %984
        %986 = vrot.lane.b32.xlu0 %v908, 16
        %v987 = vpop.permute.xlu0 %986
        %988 = vrot.lane.b32.xlu0 %v909, 16
        %v989 = vpop.permute.xlu0 %988
        %990 = vrot.lane.b32.xlu0 %v910, 16
        %v991 = vpop.permute.xlu0 %990
        %992 = vrot.lane.b32.xlu0 %v911, 16
        %v993 = vpop.permute.xlu0 %992
        %994 = vrot.lane.b32.xlu0 %v912, 16
        %v995 = vpop.permute.xlu0 %994
        %996 = vrot.lane.b32.xlu0 %v913, 16
        %v997 = vpop.permute.xlu0 %996
        %998 = vrot.lane.b32.xlu0 %v914, 16
        %v999 = vpop.permute.xlu0 %998
        %1000 = vrot.lane.b32.xlu0 %v915, 16
        %v1001 = vpop.permute.xlu0 %1000
        %1002 = vrot.lane.b32.xlu0 %v916, 16
        %v1003 = vpop.permute.xlu0 %1002
        %1004 = vrot.lane.b32.xlu0 %v917, 16
        %v1005 = vpop.permute.xlu0 %1004
        %1006 = vrot.lane.b32.xlu0 %v918, 16
        %v1007 = vpop.permute.xlu0 %1006
        %1008 = vrot.lane.b32.xlu0 %v919, 16
        %v1009 = vpop.permute.xlu0 %1008
        %1010 = vrot.lane.b32.xlu0 %v920, 16
        %v1011 = vpop.permute.xlu0 %1010
        %1012 = vrot.lane.b32.xlu0 %v921, 16
        %v1013 = vpop.permute.xlu0 %1012
        %1014 = vrot.lane.b32.xlu0 %v922, 16
        %v1015 = vpop.permute.xlu0 %1014
        %1016 = vrot.lane.b32.xlu0 %v923, 16
        %v1017 = vpop.permute.xlu0 %1016
        %1018 = vrot.lane.b32.xlu0 %v924, 16
        %v1019 = vpop.permute.xlu0 %1018
        %1020 = vrot.lane.b32.xlu0 %v925, 16
        %v1021 = vpop.permute.xlu0 %1020
        %vm1054 = vcmask 162944
        %1055 = vst.msk [vmem:[#allocation2] sm:$0xff] %vm1054, %v959
        %1056 = vst.msk [vmem:[#allocation2 + $0x8] sm:$0xff] %vm1054, %v961
        %1057 = vst.msk [vmem:[#allocation2 + $0x10] sm:$0xff] %vm1054, %v963
        %1058 = vst.msk [vmem:[#allocation2 + $0x18] sm:$0xff] %vm1054, %v965
        %1059 = vst.msk [vmem:[#allocation2 + $0x20] sm:$0xff] %vm1054, %v967
        %1060 = vst.msk [vmem:[#allocation2 + $0x28] sm:$0xff] %vm1054, %v969
        %1061 = vst.msk [vmem:[#allocation2 + $0x30] sm:$0xff] %vm1054, %v971
        %1062 = vst.msk [vmem:[#allocation2 + $0x38] sm:$0xff] %vm1054, %v973
        %1063 = vst.msk [vmem:[#allocation2 + $0x40] sm:$0xff] %vm1054, %v975
        %1064 = vst.msk [vmem:[#allocation2 + $0x48] sm:$0xff] %vm1054, %v977
        %1065 = vst.msk [vmem:[#allocation2 + $0x50] sm:$0xff] %vm1054, %v979
        %1066 = vst.msk [vmem:[#allocation2 + $0x58] sm:$0xff] %vm1054, %v981
        %1067 = vst.msk [vmem:[#allocation2 + $0x60] sm:$0xff] %vm1054, %v983
        %1068 = vst.msk [vmem:[#allocation2 + $0x68] sm:$0xff] %vm1054, %v985
        %1069 = vst.msk [vmem:[#allocation2 + $0x70] sm:$0xff] %vm1054, %v987
        %1070 = vst.msk [vmem:[#allocation2 + $0x78] sm:$0xff] %vm1054, %v989
        %1071 = vst.msk [vmem:[#allocation2 + $0x80] sm:$0xff] %vm1054, %v991
        %1072 = vst.msk [vmem:[#allocation2 + $0x88] sm:$0xff] %vm1054, %v993
        %1073 = vst.msk [vmem:[#allocation2 + $0x90] sm:$0xff] %vm1054, %v995
        %1074 = vst.msk [vmem:[#allocation2 + $0x98] sm:$0xff] %vm1054, %v997
        %1075 = vst.msk [vmem:[#allocation2 + $0xa0] sm:$0xff] %vm1054, %v999
        %1076 = vst.msk [vmem:[#allocation2 + $0xa8] sm:$0xff] %vm1054, %v1001
        %1077 = vst.msk [vmem:[#allocation2 + $0xb0] sm:$0xff] %vm1054, %v1003
        %1078 = vst.msk [vmem:[#allocation2 + $0xb8] sm:$0xff] %vm1054, %v1005
        %1079 = vst.msk [vmem:[#allocation2 + $0xc0] sm:$0xff] %vm1054, %v1007
        %1080 = vst.msk [vmem:[#allocation2 + $0xc8] sm:$0xff] %vm1054, %v1009
        %1081 = vst.msk [vmem:[#allocation2 + $0xd0] sm:$0xff] %vm1054, %v1011
        %1082 = vst.msk [vmem:[#allocation2 + $0xd8] sm:$0xff] %vm1054, %v1013
        %1083 = vst.msk [vmem:[#allocation2 + $0xe0] sm:$0xff] %vm1054, %v1015
        %1084 = vst.msk [vmem:[#allocation2 + $0xe8] sm:$0xff] %vm1054, %v1017
        %1085 = vst.msk [vmem:[#allocation2 + $0xf0] sm:$0xff] %vm1054, %v1019
        %1086 = vst.msk [vmem:[#allocation2 + $0xf8] sm:$0xff] %vm1054, %v1021
        %v1087 = vld [vmem:[%s700 + $0x2] sm:$0xff]
        %v1088 = vld [vmem:[%s700 + $0xa] sm:$0xff]
        %v1089 = vld [vmem:[%s700 + $0x1a] sm:$0xff]
        %v1090 = vld [vmem:[%s700 + $0x22] sm:$0xff]
        %v1091 = vld [vmem:[%s700 + $0x32] sm:$0xff]
        %v1092 = vld [vmem:[%s700 + $0x3a] sm:$0xff]
        %v1093 = vld [vmem:[%s700 + $0x4a] sm:$0xff]
        %v1094 = vld [vmem:[%s700 + $0x52] sm:$0xff]
        %v1095 = vld [vmem:[%s700 + $0x62] sm:$0xff]
        %v1096 = vld [vmem:[%s700 + $0x6a] sm:$0xff]
        %v1097 = vld [vmem:[%s700 + $0x7a] sm:$0xff]
        %v1098 = vld [vmem:[%s700 + $0x82] sm:$0xff]
        %v1099 = vld [vmem:[%s700 + $0x92] sm:$0xff]
        %v1100 = vld [vmem:[%s700 + $0x9a] sm:$0xff]
        %v1101 = vld [vmem:[%s700 + $0xaa] sm:$0xff]
        %v1102 = vld [vmem:[%s700 + $0xb2] sm:$0xff]
        %v1103 = vld [vmem:[%s700 + $0xc2] sm:$0xff]
        %v1104 = vld [vmem:[%s700 + $0xca] sm:$0xff]
        %v1105 = vld [vmem:[%s700 + $0xda] sm:$0xff]
        %v1106 = vld [vmem:[%s700 + $0xe2] sm:$0xff]
        %v1107 = vld [vmem:[%s700 + $0xf2] sm:$0xff]
        %v1108 = vld [vmem:[%s700 + $0xfa] sm:$0xff]
        %v1109 = vld [vmem:[%s700 + $0x10a] sm:$0xff]
        %v1110 = vld [vmem:[%s700 + $0x112] sm:$0xff]
        %v1111 = vld [vmem:[%s700 + $0x122] sm:$0xff]
        %v1112 = vld [vmem:[%s700 + $0x12a] sm:$0xff]
        %v1113 = vld [vmem:[%s700 + $0x13a] sm:$0xff]
        %v1114 = vld [vmem:[%s700 + $0x142] sm:$0xff]
        %v1115 = vld [vmem:[%s700 + $0x152] sm:$0xff]
        %v1116 = vld [vmem:[%s700 + $0x15a] sm:$0xff]
        %v1117 = vld [vmem:[%s700 + $0x16a] sm:$0xff]
        %v1118 = vld [vmem:[%s700 + $0x172] sm:$0xff]
        %1151 = vrot.lane.b32.xlu0 %v1087, 20
        %v1152 = vpop.permute.xlu0 %1151
        %1153 = vrot.lane.b32.xlu0 %v1088, 20
        %v1154 = vpop.permute.xlu0 %1153
        %1155 = vrot.lane.b32.xlu0 %v1089, 20
        %v1156 = vpop.permute.xlu0 %1155
        %1157 = vrot.lane.b32.xlu0 %v1090, 20
        %v1158 = vpop.permute.xlu0 %1157
        %1159 = vrot.lane.b32.xlu0 %v1091, 20
        %v1160 = vpop.permute.xlu0 %1159
        %1161 = vrot.lane.b32.xlu0 %v1092, 20
        %v1162 = vpop.permute.xlu0 %1161
        %1163 = vrot.lane.b32.xlu0 %v1093, 20
        %v1164 = vpop.permute.xlu0 %1163
        %1165 = vrot.lane.b32.xlu0 %v1094, 20
        %v1166 = vpop.permute.xlu0 %1165
        %1167 = vrot.lane.b32.xlu0 %v1095, 20
        %v1168 = vpop.permute.xlu0 %1167
        %1169 = vrot.lane.b32.xlu0 %v1096, 20
        %v1170 = vpop.permute.xlu0 %1169
        %1171 = vrot.lane.b32.xlu0 %v1097, 20
        %v1172 = vpop.permute.xlu0 %1171
        %1173 = vrot.lane.b32.xlu0 %v1098, 20
        %v1174 = vpop.permute.xlu0 %1173
        %1175 = vrot.lane.b32.xlu0 %v1099, 20
        %v1176 = vpop.permute.xlu0 %1175
        %1177 = vrot.lane.b32.xlu0 %v1100, 20
        %v1178 = vpop.permute.xlu0 %1177
        %1179 = vrot.lane.b32.xlu0 %v1101, 20
        %v1180 = vpop.permute.xlu0 %1179
        %1181 = vrot.lane.b32.xlu0 %v1102, 20
        %v1182 = vpop.permute.xlu0 %1181
        %1183 = vrot.lane.b32.xlu0 %v1103, 20
        %v1184 = vpop.permute.xlu0 %1183
        %1185 = vrot.lane.b32.xlu0 %v1104, 20
        %v1186 = vpop.permute.xlu0 %1185
        %1187 = vrot.lane.b32.xlu0 %v1105, 20
        %v1188 = vpop.permute.xlu0 %1187
        %1189 = vrot.lane.b32.xlu0 %v1106, 20
        %v1190 = vpop.permute.xlu0 %1189
        %1191 = vrot.lane.b32.xlu0 %v1107, 20
        %v1192 = vpop.permute.xlu0 %1191
        %1193 = vrot.lane.b32.xlu0 %v1108, 20
        %v1194 = vpop.permute.xlu0 %1193
        %1195 = vrot.lane.b32.xlu0 %v1109, 20
        %v1196 = vpop.permute.xlu0 %1195
        %1197 = vrot.lane.b32.xlu0 %v1110, 20
        %v1198 = vpop.permute.xlu0 %1197
        %1199 = vrot.lane.b32.xlu0 %v1111, 20
        %v1200 = vpop.permute.xlu0 %1199
        %1201 = vrot.lane.b32.xlu0 %v1112, 20
        %v1202 = vpop.permute.xlu0 %1201
        %1203 = vrot.lane.b32.xlu0 %v1113, 20
        %v1204 = vpop.permute.xlu0 %1203
        %1205 = vrot.lane.b32.xlu0 %v1114, 20
        %v1206 = vpop.permute.xlu0 %1205
        %1207 = vrot.lane.b32.xlu0 %v1115, 20
        %v1208 = vpop.permute.xlu0 %1207
        %1209 = vrot.lane.b32.xlu0 %v1116, 20
        %v1210 = vpop.permute.xlu0 %1209
        %1211 = vrot.lane.b32.xlu0 %v1117, 20
        %v1212 = vpop.permute.xlu0 %1211
        %1213 = vrot.lane.b32.xlu0 %v1118, 20
        %v1214 = vpop.permute.xlu0 %1213
        %vm1247 = vcmask 195744
        %1248 = vst.msk [vmem:[#allocation2] sm:$0xff] %vm1247, %v1152
        %1249 = vst.msk [vmem:[#allocation2 + $0x8] sm:$0xff] %vm1247, %v1154
        %1250 = vst.msk [vmem:[#allocation2 + $0x10] sm:$0xff] %vm1247, %v1156
        %1251 = vst.msk [vmem:[#allocation2 + $0x18] sm:$0xff] %vm1247, %v1158
        %1252 = vst.msk [vmem:[#allocation2 + $0x20] sm:$0xff] %vm1247, %v1160
        %1253 = vst.msk [vmem:[#allocation2 + $0x28] sm:$0xff] %vm1247, %v1162
        %1254 = vst.msk [vmem:[#allocation2 + $0x30] sm:$0xff] %vm1247, %v1164
        %1255 = vst.msk [vmem:[#allocation2 + $0x38] sm:$0xff] %vm1247, %v1166
        %1256 = vst.msk [vmem:[#allocation2 + $0x40] sm:$0xff] %vm1247, %v1168
        %1257 = vst.msk [vmem:[#allocation2 + $0x48] sm:$0xff] %vm1247, %v1170
        %1258 = vst.msk [vmem:[#allocation2 + $0x50] sm:$0xff] %vm1247, %v1172
        %1259 = vst.msk [vmem:[#allocation2 + $0x58] sm:$0xff] %vm1247, %v1174
        %1260 = vst.msk [vmem:[#allocation2 + $0x60] sm:$0xff] %vm1247, %v1176
        %1261 = vst.msk [vmem:[#allocation2 + $0x68] sm:$0xff] %vm1247, %v1178
        %1262 = vst.msk [vmem:[#allocation2 + $0x70] sm:$0xff] %vm1247, %v1180
        %1263 = vst.msk [vmem:[#allocation2 + $0x78] sm:$0xff] %vm1247, %v1182
        %1264 = vst.msk [vmem:[#allocation2 + $0x80] sm:$0xff] %vm1247, %v1184
        %1265 = vst.msk [vmem:[#allocation2 + $0x88] sm:$0xff] %vm1247, %v1186
        %1266 = vst.msk [vmem:[#allocation2 + $0x90] sm:$0xff] %vm1247, %v1188
        %1267 = vst.msk [vmem:[#allocation2 + $0x98] sm:$0xff] %vm1247, %v1190
        %1268 = vst.msk [vmem:[#allocation2 + $0xa0] sm:$0xff] %vm1247, %v1192
        %1269 = vst.msk [vmem:[#allocation2 + $0xa8] sm:$0xff] %vm1247, %v1194
        %1270 = vst.msk [vmem:[#allocation2 + $0xb0] sm:$0xff] %vm1247, %v1196
        %1271 = vst.msk [vmem:[#allocation2 + $0xb8] sm:$0xff] %vm1247, %v1198
        %1272 = vst.msk [vmem:[#allocation2 + $0xc0] sm:$0xff] %vm1247, %v1200
        %1273 = vst.msk [vmem:[#allocation2 + $0xc8] sm:$0xff] %vm1247, %v1202
        %1274 = vst.msk [vmem:[#allocation2 + $0xd0] sm:$0xff] %vm1247, %v1204
        %1275 = vst.msk [vmem:[#allocation2 + $0xd8] sm:$0xff] %vm1247, %v1206
        %1276 = vst.msk [vmem:[#allocation2 + $0xe0] sm:$0xff] %vm1247, %v1208
        %1277 = vst.msk [vmem:[#allocation2 + $0xe8] sm:$0xff] %vm1247, %v1210
        %1278 = vst.msk [vmem:[#allocation2 + $0xf0] sm:$0xff] %vm1247, %v1212
        %1279 = vst.msk [vmem:[#allocation2 + $0xf8] sm:$0xff] %vm1247, %v1214
        %s1280 = sadd.s32 %s244, 2
        %s1281 = smul.u32 %s1280, 24
        %s1282 = scalar_lea.vmem %s219, %s1281
        %v1283 = vld [vmem:[%s1282] sm:$0xff]
        %v1284 = vld [vmem:[%s1282 + $0x8] sm:$0xff]
        %v1285 = vld [vmem:[%s1282 + $0x18] sm:$0xff]
        %v1286 = vld [vmem:[%s1282 + $0x20] sm:$0xff]
        %v1287 = vld [vmem:[%s1282 + $0x30] sm:$0xff]
        %v1288 = vld [vmem:[%s1282 + $0x38] sm:$0xff]
        %v1289 = vld [vmem:[%s1282 + $0x48] sm:$0xff]
        %v1290 = vld [vmem:[%s1282 + $0x50] sm:$0xff]
        %v1291 = vld [vmem:[%s1282 + $0x60] sm:$0xff]
        %v1292 = vld [vmem:[%s1282 + $0x68] sm:$0xff]
        %v1293 = vld [vmem:[%s1282 + $0x78] sm:$0xff]
        %v1294 = vld [vmem:[%s1282 + $0x80] sm:$0xff]
        %v1295 = vld [vmem:[%s1282 + $0x90] sm:$0xff]
        %v1296 = vld [vmem:[%s1282 + $0x98] sm:$0xff]
        %v1297 = vld [vmem:[%s1282 + $0xa8] sm:$0xff]
        %v1298 = vld [vmem:[%s1282 + $0xb0] sm:$0xff]
        %v1299 = vld [vmem:[%s1282 + $0xc0] sm:$0xff]
        %v1300 = vld [vmem:[%s1282 + $0xc8] sm:$0xff]
        %v1301 = vld [vmem:[%s1282 + $0xd8] sm:$0xff]
        %v1302 = vld [vmem:[%s1282 + $0xe0] sm:$0xff]
        %v1303 = vld [vmem:[%s1282 + $0xf0] sm:$0xff]
        %v1304 = vld [vmem:[%s1282 + $0xf8] sm:$0xff]
        %v1305 = vld [vmem:[%s1282 + $0x108] sm:$0xff]
        %v1306 = vld [vmem:[%s1282 + $0x110] sm:$0xff]
        %v1307 = vld [vmem:[%s1282 + $0x120] sm:$0xff]
        %v1308 = vld [vmem:[%s1282 + $0x128] sm:$0xff]
        %v1309 = vld [vmem:[%s1282 + $0x138] sm:$0xff]
        %v1310 = vld [vmem:[%s1282 + $0x140] sm:$0xff]
        %v1311 = vld [vmem:[%s1282 + $0x150] sm:$0xff]
        %v1312 = vld [vmem:[%s1282 + $0x158] sm:$0xff]
        %v1313 = vld [vmem:[%s1282 + $0x168] sm:$0xff]
        %v1314 = vld [vmem:[%s1282 + $0x170] sm:$0xff]
        %1347 = vrot.lane.b32.xlu0 %v1283, 24
        %v1348 = vpop.permute.xlu0 %1347
        %1349 = vrot.lane.b32.xlu0 %v1284, 24
        %v1350 = vpop.permute.xlu0 %1349
        %1351 = vrot.lane.b32.xlu0 %v1285, 24
        %v1352 = vpop.permute.xlu0 %1351
        %1353 = vrot.lane.b32.xlu0 %v1286, 24
        %v1354 = vpop.permute.xlu0 %1353
        %1355 = vrot.lane.b32.xlu0 %v1287, 24
        %v1356 = vpop.permute.xlu0 %1355
        %1357 = vrot.lane.b32.xlu0 %v1288, 24
        %v1358 = vpop.permute.xlu0 %1357
        %1359 = vrot.lane.b32.xlu0 %v1289, 24
        %v1360 = vpop.permute.xlu0 %1359
        %1361 = vrot.lane.b32.xlu0 %v1290, 24
        %v1362 = vpop.permute.xlu0 %1361
        %1363 = vrot.lane.b32.xlu0 %v1291, 24
        %v1364 = vpop.permute.xlu0 %1363
        %1365 = vrot.lane.b32.xlu0 %v1292, 24
        %v1366 = vpop.permute.xlu0 %1365
        %1367 = vrot.lane.b32.xlu0 %v1293, 24
        %v1368 = vpop.permute.xlu0 %1367
        %1369 = vrot.lane.b32.xlu0 %v1294, 24
        %v1370 = vpop.permute.xlu0 %1369
        %1371 = vrot.lane.b32.xlu0 %v1295, 24
        %v1372 = vpop.permute.xlu0 %1371
        %1373 = vrot.lane.b32.xlu0 %v1296, 24
        %v1374 = vpop.permute.xlu0 %1373
        %1375 = vrot.lane.b32.xlu0 %v1297, 24
        %v1376 = vpop.permute.xlu0 %1375
        %1377 = vrot.lane.b32.xlu0 %v1298, 24
        %v1378 = vpop.permute.xlu0 %1377
        %1379 = vrot.lane.b32.xlu0 %v1299, 24
        %v1380 = vpop.permute.xlu0 %1379
        %1381 = vrot.lane.b32.xlu0 %v1300, 24
        %v1382 = vpop.permute.xlu0 %1381
        %1383 = vrot.lane.b32.xlu0 %v1301, 24
        %v1384 = vpop.permute.xlu0 %1383
        %1385 = vrot.lane.b32.xlu0 %v1302, 24
        %v1386 = vpop.permute.xlu0 %1385
        %1387 = vrot.lane.b32.xlu0 %v1303, 24
        %v1388 = vpop.permute.xlu0 %1387
        %1389 = vrot.lane.b32.xlu0 %v1304, 24
        %v1390 = vpop.permute.xlu0 %1389
        %1391 = vrot.lane.b32.xlu0 %v1305, 24
        %v1392 = vpop.permute.xlu0 %1391
        %1393 = vrot.lane.b32.xlu0 %v1306, 24
        %v1394 = vpop.permute.xlu0 %1393
        %1395 = vrot.lane.b32.xlu0 %v1307, 24
        %v1396 = vpop.permute.xlu0 %1395
        %1397 = vrot.lane.b32.xlu0 %v1308, 24
        %v1398 = vpop.permute.xlu0 %1397
        %1399 = vrot.lane.b32.xlu0 %v1309, 24
        %v1400 = vpop.permute.xlu0 %1399
        %1401 = vrot.lane.b32.xlu0 %v1310, 24
        %v1402 = vpop.permute.xlu0 %1401
        %1403 = vrot.lane.b32.xlu0 %v1311, 24
        %v1404 = vpop.permute.xlu0 %1403
        %1405 = vrot.lane.b32.xlu0 %v1312, 24
        %v1406 = vpop.permute.xlu0 %1405
        %1407 = vrot.lane.b32.xlu0 %v1313, 24
        %v1408 = vpop.permute.xlu0 %1407
        %1409 = vrot.lane.b32.xlu0 %v1314, 24
        %v1410 = vpop.permute.xlu0 %1409
        %vm1443 = vcmask 228544
        %1444 = vst.msk [vmem:[#allocation2] sm:$0xff] %vm1443, %v1348
        %1445 = vst.msk [vmem:[#allocation2 + $0x8] sm:$0xff] %vm1443, %v1350
        %1446 = vst.msk [vmem:[#allocation2 + $0x10] sm:$0xff] %vm1443, %v1352
        %1447 = vst.msk [vmem:[#allocation2 + $0x18] sm:$0xff] %vm1443, %v1354
        %1448 = vst.msk [vmem:[#allocation2 + $0x20] sm:$0xff] %vm1443, %v1356
        %1449 = vst.msk [vmem:[#allocation2 + $0x28] sm:$0xff] %vm1443, %v1358
        %1450 = vst.msk [vmem:[#allocation2 + $0x30] sm:$0xff] %vm1443, %v1360
        %1451 = vst.msk [vmem:[#allocation2 + $0x38] sm:$0xff] %vm1443, %v1362
        %1452 = vst.msk [vmem:[#allocation2 + $0x40] sm:$0xff] %vm1443, %v1364
        %1453 = vst.msk [vmem:[#allocation2 + $0x48] sm:$0xff] %vm1443, %v1366
        %1454 = vst.msk [vmem:[#allocation2 + $0x50] sm:$0xff] %vm1443, %v1368
        %1455 = vst.msk [vmem:[#allocation2 + $0x58] sm:$0xff] %vm1443, %v1370
        %1456 = vst.msk [vmem:[#allocation2 + $0x60] sm:$0xff] %vm1443, %v1372
        %1457 = vst.msk [vmem:[#allocation2 + $0x68] sm:$0xff] %vm1443, %v1374
        %1458 = vst.msk [vmem:[#allocation2 + $0x70] sm:$0xff] %vm1443, %v1376
        %1459 = vst.msk [vmem:[#allocation2 + $0x78] sm:$0xff] %vm1443, %v1378
        %1460 = vst.msk [vmem:[#allocation2 + $0x80] sm:$0xff] %vm1443, %v1380
        %1461 = vst.msk [vmem:[#allocation2 + $0x88] sm:$0xff] %vm1443, %v1382
        %1462 = vst.msk [vmem:[#allocation2 + $0x90] sm:$0xff] %vm1443, %v1384
        %1463 = vst.msk [vmem:[#allocation2 + $0x98] sm:$0xff] %vm1443, %v1386
        %1464 = vst.msk [vmem:[#allocation2 + $0xa0] sm:$0xff] %vm1443, %v1388
        %1465 = vst.msk [vmem:[#allocation2 + $0xa8] sm:$0xff] %vm1443, %v1390
        %1466 = vst.msk [vmem:[#allocation2 + $0xb0] sm:$0xff] %vm1443, %v1392
        %1467 = vst.msk [vmem:[#allocation2 + $0xb8] sm:$0xff] %vm1443, %v1394
        %1468 = vst.msk [vmem:[#allocation2 + $0xc0] sm:$0xff] %vm1443, %v1396
        %1469 = vst.msk [vmem:[#allocation2 + $0xc8] sm:$0xff] %vm1443, %v1398
        %1470 = vst.msk [vmem:[#allocation2 + $0xd0] sm:$0xff] %vm1443, %v1400
        %1471 = vst.msk [vmem:[#allocation2 + $0xd8] sm:$0xff] %vm1443, %v1402
        %1472 = vst.msk [vmem:[#allocation2 + $0xe0] sm:$0xff] %vm1443, %v1404
        %1473 = vst.msk [vmem:[#allocation2 + $0xe8] sm:$0xff] %vm1443, %v1406
        %1474 = vst.msk [vmem:[#allocation2 + $0xf0] sm:$0xff] %vm1443, %v1408
        %1475 = vst.msk [vmem:[#allocation2 + $0xf8] sm:$0xff] %vm1443, %v1410
        %v1476 = vld [vmem:[%s1282 + $0x1] sm:$0xff]
        %v1477 = vld [vmem:[%s1282 + $0x9] sm:$0xff]
        %v1478 = vld [vmem:[%s1282 + $0x19] sm:$0xff]
        %v1479 = vld [vmem:[%s1282 + $0x21] sm:$0xff]
        %v1480 = vld [vmem:[%s1282 + $0x31] sm:$0xff]
        %v1481 = vld [vmem:[%s1282 + $0x39] sm:$0xff]
        %v1482 = vld [vmem:[%s1282 + $0x49] sm:$0xff]
        %v1483 = vld [vmem:[%s1282 + $0x51] sm:$0xff]
        %v1484 = vld [vmem:[%s1282 + $0x61] sm:$0xff]
        %v1485 = vld [vmem:[%s1282 + $0x69] sm:$0xff]
        %v1486 = vld [vmem:[%s1282 + $0x79] sm:$0xff]
        %v1487 = vld [vmem:[%s1282 + $0x81] sm:$0xff]
        %v1488 = vld [vmem:[%s1282 + $0x91] sm:$0xff]
        %v1489 = vld [vmem:[%s1282 + $0x99] sm:$0xff]
        %v1490 = vld [vmem:[%s1282 + $0xa9] sm:$0xff]
        %v1491 = vld [vmem:[%s1282 + $0xb1] sm:$0xff]
        %v1492 = vld [vmem:[%s1282 + $0xc1] sm:$0xff]
        %v1493 = vld [vmem:[%s1282 + $0xc9] sm:$0xff]
        %v1494 = vld [vmem:[%s1282 + $0xd9] sm:$0xff]
        %v1495 = vld [vmem:[%s1282 + $0xe1] sm:$0xff]
        %v1496 = vld [vmem:[%s1282 + $0xf1] sm:$0xff]
        %v1497 = vld [vmem:[%s1282 + $0xf9] sm:$0xff]
        %v1498 = vld [vmem:[%s1282 + $0x109] sm:$0xff]
        %v1499 = vld [vmem:[%s1282 + $0x111] sm:$0xff]
        %v1500 = vld [vmem:[%s1282 + $0x121] sm:$0xff]
        %v1501 = vld [vmem:[%s1282 + $0x129] sm:$0xff]
        %v1502 = vld [vmem:[%s1282 + $0x139] sm:$0xff]
        %v1503 = vld [vmem:[%s1282 + $0x141] sm:$0xff]
        %v1504 = vld [vmem:[%s1282 + $0x151] sm:$0xff]
        %v1505 = vld [vmem:[%s1282 + $0x159] sm:$0xff]
        %v1506 = vld [vmem:[%s1282 + $0x169] sm:$0xff]
        %v1507 = vld [vmem:[%s1282 + $0x171] sm:$0xff]
        %1540 = vrot.lane.b32.xlu0 %v1476, 28
        %v1541 = vpop.permute.xlu0 %1540
        %1542 = vrot.lane.b32.xlu0 %v1477, 28
        %v1543 = vpop.permute.xlu0 %1542
        %1544 = vrot.lane.b32.xlu0 %v1478, 28
        %v1545 = vpop.permute.xlu0 %1544
        %1546 = vrot.lane.b32.xlu0 %v1479, 28
        %v1547 = vpop.permute.xlu0 %1546
        %1548 = vrot.lane.b32.xlu0 %v1480, 28
        %v1549 = vpop.permute.xlu0 %1548
        %1550 = vrot.lane.b32.xlu0 %v1481, 28
        %v1551 = vpop.permute.xlu0 %1550
        %1552 = vrot.lane.b32.xlu0 %v1482, 28
        %v1553 = vpop.permute.xlu0 %1552
        %1554 = vrot.lane.b32.xlu0 %v1483, 28
        %v1555 = vpop.permute.xlu0 %1554
        %1556 = vrot.lane.b32.xlu0 %v1484, 28
        %v1557 = vpop.permute.xlu0 %1556
        %1558 = vrot.lane.b32.xlu0 %v1485, 28
        %v1559 = vpop.permute.xlu0 %1558
        %1560 = vrot.lane.b32.xlu0 %v1486, 28
        %v1561 = vpop.permute.xlu0 %1560
        %1562 = vrot.lane.b32.xlu0 %v1487, 28
        %v1563 = vpop.permute.xlu0 %1562
        %1564 = vrot.lane.b32.xlu0 %v1488, 28
        %v1565 = vpop.permute.xlu0 %1564
        %1566 = vrot.lane.b32.xlu0 %v1489, 28
        %v1567 = vpop.permute.xlu0 %1566
        %1568 = vrot.lane.b32.xlu0 %v1490, 28
        %v1569 = vpop.permute.xlu0 %1568
        %1570 = vrot.lane.b32.xlu0 %v1491, 28
        %v1571 = vpop.permute.xlu0 %1570
        %1572 = vrot.lane.b32.xlu0 %v1492, 28
        %v1573 = vpop.permute.xlu0 %1572
        %1574 = vrot.lane.b32.xlu0 %v1493, 28
        %v1575 = vpop.permute.xlu0 %1574
        %1576 = vrot.lane.b32.xlu0 %v1494, 28
        %v1577 = vpop.permute.xlu0 %1576
        %1578 = vrot.lane.b32.xlu0 %v1495, 28
        %v1579 = vpop.permute.xlu0 %1578
        %1580 = vrot.lane.b32.xlu0 %v1496, 28
        %v1581 = vpop.permute.xlu0 %1580
        %1582 = vrot.lane.b32.xlu0 %v1497, 28
        %v1583 = vpop.permute.xlu0 %1582
        %1584 = vrot.lane.b32.xlu0 %v1498, 28
        %v1585 = vpop.permute.xlu0 %1584
        %1586 = vrot.lane.b32.xlu0 %v1499, 28
        %v1587 = vpop.permute.xlu0 %1586
        %1588 = vrot.lane.b32.xlu0 %v1500, 28
        %v1589 = vpop.permute.xlu0 %1588
        %1590 = vrot.lane.b32.xlu0 %v1501, 28
        %v1591 = vpop.permute.xlu0 %1590
        %1592 = vrot.lane.b32.xlu0 %v1502, 28
        %v1593 = vpop.permute.xlu0 %1592
        %1594 = vrot.lane.b32.xlu0 %v1503, 28
        %v1595 = vpop.permute.xlu0 %1594
        %1596 = vrot.lane.b32.xlu0 %v1504, 28
        %v1597 = vpop.permute.xlu0 %1596
        %1598 = vrot.lane.b32.xlu0 %v1505, 28
        %v1599 = vpop.permute.xlu0 %1598
        %1600 = vrot.lane.b32.xlu0 %v1506, 28
        %v1601 = vpop.permute.xlu0 %1600
        %1602 = vrot.lane.b32.xlu0 %v1507, 28
        %v1603 = vpop.permute.xlu0 %1602
        %vm1636 = vcmask 261344
        %1637 = vst.msk [vmem:[#allocation2] sm:$0xff] %vm1636, %v1541
        %1638 = vst.msk [vmem:[#allocation2 + $0x8] sm:$0xff] %vm1636, %v1543
        %1639 = vst.msk [vmem:[#allocation2 + $0x10] sm:$0xff] %vm1636, %v1545
        %1640 = vst.msk [vmem:[#allocation2 + $0x18] sm:$0xff] %vm1636, %v1547
        %1641 = vst.msk [vmem:[#allocation2 + $0x20] sm:$0xff] %vm1636, %v1549
        %1642 = vst.msk [vmem:[#allocation2 + $0x28] sm:$0xff] %vm1636, %v1551
        %1643 = vst.msk [vmem:[#allocation2 + $0x30] sm:$0xff] %vm1636, %v1553
        %1644 = vst.msk [vmem:[#allocation2 + $0x38] sm:$0xff] %vm1636, %v1555
        %1645 = vst.msk [vmem:[#allocation2 + $0x40] sm:$0xff] %vm1636, %v1557
        %1646 = vst.msk [vmem:[#allocation2 + $0x48] sm:$0xff] %vm1636, %v1559
        %1647 = vst.msk [vmem:[#allocation2 + $0x50] sm:$0xff] %vm1636, %v1561
        %1648 = vst.msk [vmem:[#allocation2 + $0x58] sm:$0xff] %vm1636, %v1563
        %1649 = vst.msk [vmem:[#allocation2 + $0x60] sm:$0xff] %vm1636, %v1565
        %1650 = vst.msk [vmem:[#allocation2 + $0x68] sm:$0xff] %vm1636, %v1567
        %1651 = vst.msk [vmem:[#allocation2 + $0x70] sm:$0xff] %vm1636, %v1569
        %1652 = vst.msk [vmem:[#allocation2 + $0x78] sm:$0xff] %vm1636, %v1571
        %1653 = vst.msk [vmem:[#allocation2 + $0x80] sm:$0xff] %vm1636, %v1573
        %1654 = vst.msk [vmem:[#allocation2 + $0x88] sm:$0xff] %vm1636, %v1575
        %1655 = vst.msk [vmem:[#allocation2 + $0x90] sm:$0xff] %vm1636, %v1577
        %1656 = vst.msk [vmem:[#allocation2 + $0x98] sm:$0xff] %vm1636, %v1579
        %1657 = vst.msk [vmem:[#allocation2 + $0xa0] sm:$0xff] %vm1636, %v1581
        %1658 = vst.msk [vmem:[#allocation2 + $0xa8] sm:$0xff] %vm1636, %v1583
        %1659 = vst.msk [vmem:[#allocation2 + $0xb0] sm:$0xff] %vm1636, %v1585
        %1660 = vst.msk [vmem:[#allocation2 + $0xb8] sm:$0xff] %vm1636, %v1587
        %1661 = vst.msk [vmem:[#allocation2 + $0xc0] sm:$0xff] %vm1636, %v1589
        %1662 = vst.msk [vmem:[#allocation2 + $0xc8] sm:$0xff] %vm1636, %v1591
        %1663 = vst.msk [vmem:[#allocation2 + $0xd0] sm:$0xff] %vm1636, %v1593
        %1664 = vst.msk [vmem:[#allocation2 + $0xd8] sm:$0xff] %vm1636, %v1595
        %1665 = vst.msk [vmem:[#allocation2 + $0xe0] sm:$0xff] %vm1636, %v1597
        %1666 = vst.msk [vmem:[#allocation2 + $0xe8] sm:$0xff] %vm1636, %v1599
        %1667 = vst.msk [vmem:[#allocation2 + $0xf0] sm:$0xff] %vm1636, %v1601
        %1668 = vst.msk [vmem:[#allocation2 + $0xf8] sm:$0xff] %vm1636, %v1603
        %v1669 = vld [vmem:[%s1282 + $0x2] sm:$0xff]
        %v1670 = vld [vmem:[%s1282 + $0xa] sm:$0xff]
        %v1671 = vld [vmem:[%s1282 + $0x1a] sm:$0xff]
        %v1672 = vld [vmem:[%s1282 + $0x22] sm:$0xff]
        %v1673 = vld [vmem:[%s1282 + $0x32] sm:$0xff]
        %v1674 = vld [vmem:[%s1282 + $0x3a] sm:$0xff]
        %v1675 = vld [vmem:[%s1282 + $0x4a] sm:$0xff]
        %v1676 = vld [vmem:[%s1282 + $0x52] sm:$0xff]
        %v1677 = vld [vmem:[%s1282 + $0x62] sm:$0xff]
        %v1678 = vld [vmem:[%s1282 + $0x6a] sm:$0xff]
        %v1679 = vld [vmem:[%s1282 + $0x7a] sm:$0xff]
        %v1680 = vld [vmem:[%s1282 + $0x82] sm:$0xff]
        %v1681 = vld [vmem:[%s1282 + $0x92] sm:$0xff]
        %v1682 = vld [vmem:[%s1282 + $0x9a] sm:$0xff]
        %v1683 = vld [vmem:[%s1282 + $0xaa] sm:$0xff]
        %v1684 = vld [vmem:[%s1282 + $0xb2] sm:$0xff]
        %v1685 = vld [vmem:[%s1282 + $0xc2] sm:$0xff]
        %v1686 = vld [vmem:[%s1282 + $0xca] sm:$0xff]
        %v1687 = vld [vmem:[%s1282 + $0xda] sm:$0xff]
        %v1688 = vld [vmem:[%s1282 + $0xe2] sm:$0xff]
        %v1689 = vld [vmem:[%s1282 + $0xf2] sm:$0xff]
        %v1690 = vld [vmem:[%s1282 + $0xfa] sm:$0xff]
        %v1691 = vld [vmem:[%s1282 + $0x10a] sm:$0xff]
        %v1692 = vld [vmem:[%s1282 + $0x112] sm:$0xff]
        %v1693 = vld [vmem:[%s1282 + $0x122] sm:$0xff]
        %v1694 = vld [vmem:[%s1282 + $0x12a] sm:$0xff]
        %v1695 = vld [vmem:[%s1282 + $0x13a] sm:$0xff]
        %v1696 = vld [vmem:[%s1282 + $0x142] sm:$0xff]
        %v1697 = vld [vmem:[%s1282 + $0x152] sm:$0xff]
        %v1698 = vld [vmem:[%s1282 + $0x15a] sm:$0xff]
        %v1699 = vld [vmem:[%s1282 + $0x16a] sm:$0xff]
        %v1700 = vld [vmem:[%s1282 + $0x172] sm:$0xff]
        %1733 = vrot.lane.b32.xlu0 %v1669, 32
        %v1734 = vpop.permute.xlu0 %1733
        %1735 = vrot.lane.b32.xlu0 %v1670, 32
        %v1736 = vpop.permute.xlu0 %1735
        %1737 = vrot.lane.b32.xlu0 %v1671, 32
        %v1738 = vpop.permute.xlu0 %1737
        %1739 = vrot.lane.b32.xlu0 %v1672, 32
        %v1740 = vpop.permute.xlu0 %1739
        %1741 = vrot.lane.b32.xlu0 %v1673, 32
        %v1742 = vpop.permute.xlu0 %1741
        %1743 = vrot.lane.b32.xlu0 %v1674, 32
        %v1744 = vpop.permute.xlu0 %1743
        %1745 = vrot.lane.b32.xlu0 %v1675, 32
        %v1746 = vpop.permute.xlu0 %1745
        %1747 = vrot.lane.b32.xlu0 %v1676, 32
        %v1748 = vpop.permute.xlu0 %1747
        %1749 = vrot.lane.b32.xlu0 %v1677, 32
        %v1750 = vpop.permute.xlu0 %1749
        %1751 = vrot.lane.b32.xlu0 %v1678, 32
        %v1752 = vpop.permute.xlu0 %1751
        %1753 = vrot.lane.b32.xlu0 %v1679, 32
        %v1754 = vpop.permute.xlu0 %1753
        %1755 = vrot.lane.b32.xlu0 %v1680, 32
        %v1756 = vpop.permute.xlu0 %1755
        %1757 = vrot.lane.b32.xlu0 %v1681, 32
        %v1758 = vpop.permute.xlu0 %1757
        %1759 = vrot.lane.b32.xlu0 %v1682, 32
        %v1760 = vpop.permute.xlu0 %1759
        %1761 = vrot.lane.b32.xlu0 %v1683, 32
        %v1762 = vpop.permute.xlu0 %1761
        %1763 = vrot.lane.b32.xlu0 %v1684, 32
        %v1764 = vpop.permute.xlu0 %1763
        %1765 = vrot.lane.b32.xlu0 %v1685, 32
        %v1766 = vpop.permute.xlu0 %1765
        %1767 = vrot.lane.b32.xlu0 %v1686, 32
        %v1768 = vpop.permute.xlu0 %1767
        %1769 = vrot.lane.b32.xlu0 %v1687, 32
        %v1770 = vpop.permute.xlu0 %1769
        %1771 = vrot.lane.b32.xlu0 %v1688, 32
        %v1772 = vpop.permute.xlu0 %1771
        %1773 = vrot.lane.b32.xlu0 %v1689, 32
        %v1774 = vpop.permute.xlu0 %1773
        %1775 = vrot.lane.b32.xlu0 %v1690, 32
        %v1776 = vpop.permute.xlu0 %1775
        %1777 = vrot.lane.b32.xlu0 %v1691, 32
        %v1778 = vpop.permute.xlu0 %1777
        %1779 = vrot.lane.b32.xlu0 %v1692, 32
        %v1780 = vpop.permute.xlu0 %1779
        %1781 = vrot.lane.b32.xlu0 %v1693, 32
        %v1782 = vpop.permute.xlu0 %1781
        %1783 = vrot.lane.b32.xlu0 %v1694, 32
        %v1784 = vpop.permute.xlu0 %1783
        %1785 = vrot.lane.b32.xlu0 %v1695, 32
        %v1786 = vpop.permute.xlu0 %1785
        %1787 = vrot.lane.b32.xlu0 %v1696, 32
        %v1788 = vpop.permute.xlu0 %1787
        %1789 = vrot.lane.b32.xlu0 %v1697, 32
        %v1790 = vpop.permute.xlu0 %1789
        %1791 = vrot.lane.b32.xlu0 %v1698, 32
        %v1792 = vpop.permute.xlu0 %1791
        %1793 = vrot.lane.b32.xlu0 %v1699, 32
        %v1794 = vpop.permute.xlu0 %1793
        %1795 = vrot.lane.b32.xlu0 %v1700, 32
        %v1796 = vpop.permute.xlu0 %1795
        %vm1829 = vcmask 294144
        %1830 = vst.msk [vmem:[#allocation2] sm:$0xff] %vm1829, %v1734
        %1831 = vst.msk [vmem:[#allocation2 + $0x8] sm:$0xff] %vm1829, %v1736
        %1832 = vst.msk [vmem:[#allocation2 + $0x10] sm:$0xff] %vm1829, %v1738
        %1833 = vst.msk [vmem:[#allocation2 + $0x18] sm:$0xff] %vm1829, %v1740
        %1834 = vst.msk [vmem:[#allocation2 + $0x20] sm:$0xff] %vm1829, %v1742
        %1835 = vst.msk [vmem:[#allocation2 + $0x28] sm:$0xff] %vm1829, %v1744
        %1836 = vst.msk [vmem:[#allocation2 + $0x30] sm:$0xff] %vm1829, %v1746
        %1837 = vst.msk [vmem:[#allocation2 + $0x38] sm:$0xff] %vm1829, %v1748
        %1838 = vst.msk [vmem:[#allocation2 + $0x40] sm:$0xff] %vm1829, %v1750
        %1839 = vst.msk [vmem:[#allocation2 + $0x48] sm:$0xff] %vm1829, %v1752
        %1840 = vst.msk [vmem:[#allocation2 + $0x50] sm:$0xff] %vm1829, %v1754
        %1841 = vst.msk [vmem:[#allocation2 + $0x58] sm:$0xff] %vm1829, %v1756
        %1842 = vst.msk [vmem:[#allocation2 + $0x60] sm:$0xff] %vm1829, %v1758
        %1843 = vst.msk [vmem:[#allocation2 + $0x68] sm:$0xff] %vm1829, %v1760
        %1844 = vst.msk [vmem:[#allocation2 + $0x70] sm:$0xff] %vm1829, %v1762
        %1845 = vst.msk [vmem:[#allocation2 + $0x78] sm:$0xff] %vm1829, %v1764
        %1846 = vst.msk [vmem:[#allocation2 + $0x80] sm:$0xff] %vm1829, %v1766
        %1847 = vst.msk [vmem:[#allocation2 + $0x88] sm:$0xff] %vm1829, %v1768
        %1848 = vst.msk [vmem:[#allocation2 + $0x90] sm:$0xff] %vm1829, %v1770
        %1849 = vst.msk [vmem:[#allocation2 + $0x98] sm:$0xff] %vm1829, %v1772
        %1850 = vst.msk [vmem:[#allocation2 + $0xa0] sm:$0xff] %vm1829, %v1774
        %1851 = vst.msk [vmem:[#allocation2 + $0xa8] sm:$0xff] %vm1829, %v1776
        %1852 = vst.msk [vmem:[#allocation2 + $0xb0] sm:$0xff] %vm1829, %v1778
        %1853 = vst.msk [vmem:[#allocation2 + $0xb8] sm:$0xff] %vm1829, %v1780
        %1854 = vst.msk [vmem:[#allocation2 + $0xc0] sm:$0xff] %vm1829, %v1782
        %1855 = vst.msk [vmem:[#allocation2 + $0xc8] sm:$0xff] %vm1829, %v1784
        %1856 = vst.msk [vmem:[#allocation2 + $0xd0] sm:$0xff] %vm1829, %v1786
        %1857 = vst.msk [vmem:[#allocation2 + $0xd8] sm:$0xff] %vm1829, %v1788
        %1858 = vst.msk [vmem:[#allocation2 + $0xe0] sm:$0xff] %vm1829, %v1790
        %1859 = vst.msk [vmem:[#allocation2 + $0xe8] sm:$0xff] %vm1829, %v1792
        %1860 = vst.msk [vmem:[#allocation2 + $0xf0] sm:$0xff] %vm1829, %v1794
        %1861 = vst.msk [vmem:[#allocation2 + $0xf8] sm:$0xff] %vm1829, %v1796
      $region36: #{duc_forward.1} parent=31 // pred_fallthru
        _
      %v1862 = vld [vmem:[#allocation2] sm:$0xff]
      %v1863 = vld [vmem:[#allocation2 + $0x8] sm:$0xff]
      %v1864 = vld [vmem:[#allocation2 + $0x10] sm:$0xff]
      %v1865 = vld [vmem:[#allocation2 + $0x18] sm:$0xff]
      %v1866 = vld [vmem:[#allocation2 + $0x20] sm:$0xff]
      %v1867 = vld [vmem:[#allocation2 + $0x28] sm:$0xff]
      %v1868 = vld [vmem:[#allocation2 + $0x30] sm:$0xff]
      %v1869 = vld [vmem:[#allocation2 + $0x38] sm:$0xff]
      %v1870 = vld [vmem:[#allocation2 + $0x40] sm:$0xff]
      %v1871 = vld [vmem:[#allocation2 + $0x48] sm:$0xff]
      %v1872 = vld [vmem:[#allocation2 + $0x50] sm:$0xff]
      %v1873 = vld [vmem:[#allocation2 + $0x58] sm:$0xff]
      %v1874 = vld [vmem:[#allocation2 + $0x60] sm:$0xff]
      %v1875 = vld [vmem:[#allocation2 + $0x68] sm:$0xff]
      %v1876 = vld [vmem:[#allocation2 + $0x70] sm:$0xff]
      %v1877 = vld [vmem:[#allocation2 + $0x78] sm:$0xff]
      %v1878 = vld [vmem:[#allocation2 + $0x80] sm:$0xff]
      %v1879 = vld [vmem:[#allocation2 + $0x88] sm:$0xff]
      %v1880 = vld [vmem:[#allocation2 + $0x90] sm:$0xff]
      %v1881 = vld [vmem:[#allocation2 + $0x98] sm:$0xff]
      %v1882 = vld [vmem:[#allocation2 + $0xa0] sm:$0xff]
      %v1883 = vld [vmem:[#allocation2 + $0xa8] sm:$0xff]
      %v1884 = vld [vmem:[#allocation2 + $0xb0] sm:$0xff]
      %v1885 = vld [vmem:[#allocation2 + $0xb8] sm:$0xff]
      %v1886 = vld [vmem:[#allocation2 + $0xc0] sm:$0xff]
      %v1887 = vld [vmem:[#allocation2 + $0xc8] sm:$0xff]
      %v1888 = vld [vmem:[#allocation2 + $0xd0] sm:$0xff]
      %v1889 = vld [vmem:[#allocation2 + $0xd8] sm:$0xff]
      %v1890 = vld [vmem:[#allocation2 + $0xe0] sm:$0xff]
      %v1891 = vld [vmem:[#allocation2 + $0xe8] sm:$0xff]
      %v1892 = vld [vmem:[#allocation2 + $0xf0] sm:$0xff]
      %v1893 = vld [vmem:[#allocation2 + $0xf8] sm:$0xff]
      %v1894 = vld [vmem:[%s223] sm:$0xff]
      %v1895 = vld [vmem:[%s223 + $0x8] sm:$0xff]
      %v1896 = vld [vmem:[%s223 + $0x10] sm:$0xff]
      %v1897 = vld [vmem:[%s223 + $0x18] sm:$0xff]
      %v1898 = vld [vmem:[%s223 + $0x20] sm:$0xf]
      %v1899 = vld [vmem:[%s226] sm:$0x1]
      %v1901 = vlaneseq
      %v1902 = vshrl.u32 %v1901, 7
      %v1903 = vsub.s32 0, %v1902
      %v1904 = vrot.slane %v1899, %v1903
      %vm1906 = vcmask 293888
      %v1908 = vsel %vm1906, %v1862, 0
      %v1911 = vsel %vm1906, %v1863, 0
      %v1914 = vsel %vm1906, %v1864, 0
      %v1917 = vsel %vm1906, %v1865, 0
      %v1920 = vsel %vm1906, %v1866, 0
      %v1923 = vsel %vm1906, %v1867, 0
      %v1926 = vsel %vm1906, %v1868, 0
      %v1929 = vsel %vm1906, %v1869, 0
      %v1932 = vsel %vm1906, %v1870, 0
      %v1935 = vsel %vm1906, %v1871, 0
      %v1938 = vsel %vm1906, %v1872, 0
      %v1941 = vsel %vm1906, %v1873, 0
      %v1944 = vsel %vm1906, %v1874, 0
      %v1947 = vsel %vm1906, %v1875, 0
      %v1950 = vsel %vm1906, %v1876, 0
      %v1953 = vsel %vm1906, %v1877, 0
      %v1956 = vsel %vm1906, %v1878, 0
      %v1959 = vsel %vm1906, %v1879, 0
      %v1962 = vsel %vm1906, %v1880, 0
      %v1965 = vsel %vm1906, %v1881, 0
      %v1968 = vsel %vm1906, %v1882, 0
      %v1971 = vsel %vm1906, %v1883, 0
      %v1974 = vsel %vm1906, %v1884, 0
      %v1977 = vsel %vm1906, %v1885, 0
      %v1980 = vsel %vm1906, %v1886, 0
      %v1983 = vsel %vm1906, %v1887, 0
      %v1986 = vsel %vm1906, %v1888, 0
      %v1989 = vsel %vm1906, %v1889, 0
      %v1992 = vsel %vm1906, %v1890, 0
      %v1995 = vsel %vm1906, %v1891, 0
      %v1998 = vsel %vm1906, %v1892, 0
      %v2001 = vsel %vm1906, %v1893, 0
      %vm2003 = vcmask 1043456
      %v2005 = vsel %vm2003, %v1898, 0
      %2007 = vmatprep.subr.mxu0 0.0
      %2008 = vmatpush1.msra.mxu0 0.0
      %2009 = vmatprep.subr.mxu0 0.0
      %2010 = vmatpush1.msra.mxu0 0.0
      %2011 = vmatprep.subr.mxu0 0.0
      %2012 = vmatpush1.msra.mxu0 0.0
      %2013 = vmatprep.subr.mxu0 0.0
      %2014 = vmatpush1.msra.mxu0 0.0
      %2015 = vmatprep.subr.mxu0 0.0
      %2016 = vmatpush1.msra.mxu0 0.0
      %2017 = vmatprep.subr.mxu0 0.0
      %2018 = vmatpush1.msra.mxu0 0.0
      %2019 = vmatprep.subr.mxu0 0.0
      %2020 = vmatpush1.msra.mxu0 0.0
      %2021 = vmatprep.subr.mxu0 0.0
      %2022 = vmatpush1.msra.mxu0 0.0
      %2023 = vmatprep.subr.mxu0 0.0
      %2024 = vmatpush1.msra.mxu0 0.0
      %2025 = vmatprep.subr.mxu0 0.0
      %2026 = vmatpush1.msra.mxu0 0.0
      %2027 = vmatprep.subr.mxu0 0.0
      %2028 = vmatpush1.msra.mxu0 0.0
      %2029 = vmatprep.subr.mxu0 0.0
      %2030 = vmatpush1.msra.mxu0 %v2005
      %2031 = vmatprep.subr.mxu0 0.0
      %2032 = vmatpush1.msra.mxu0 %v1897
      %2033 = vmatprep.subr.mxu0 0.0
      %2034 = vmatpush1.msra.mxu0 %v1896
      %2035 = vmatprep.subr.mxu0 0.0
      %2036 = vmatpush1.msra.mxu0 %v1895
      %2037 = vmatprep.subr.mxu0 0.0
      %2038 = vmatpush1.msra.mxu0 %v1894
      %2039 = vmatprep.subr.mxu0 0.0
      %2040 = vmatpush2.msra.mxu0 0.0
      %2041 = vmatprep.subr.mxu0 0.0
      %2042 = vmatpush2.msra.mxu0 0.0
      %2043 = vmatprep.subr.mxu0 0.0
      %2044 = vmatpush2.msra.mxu0 0.0
      %2045 = vmatprep.subr.mxu0 0.0
      %2046 = vmatpush2.msra.mxu0 0.0
      %2047 = vmatprep.subr.mxu0 0.0
      %2048 = vmatpush2.msra.mxu0 0.0
      %2049 = vmatprep.subr.mxu0 0.0
      %2050 = vmatpush2.msra.mxu0 0.0
      %2051 = vmatprep.subr.mxu0 0.0
      %2052 = vmatpush2.msra.mxu0 0.0
      %2053 = vmatprep.subr.mxu0 0.0
      %2054 = vmatpush2.msra.mxu0 0.0
      %2055 = vmatprep.subr.mxu0 0.0
      %2056 = vmatpush2.msra.mxu0 0.0
      %2057 = vmatprep.subr.mxu0 0.0
      %2058 = vmatpush2.msra.mxu0 0.0
      %2059 = vmatprep.subr.mxu0 0.0
      %2060 = vmatpush2.msra.mxu0 0.0
      %2061 = vmatprep.subr.mxu0 0.0
      %2062 = vmatpush2.msra.mxu0 0.0
      %2063 = vmatprep.subr.mxu0 0.0
      %2064 = vmatpush2.msra.mxu0 0.0
      %2065 = vmatprep.subr.mxu0 0.0
      %2066 = vmatpush2.msra.mxu0 0.0
      %2067 = vmatprep.subr.mxu0 0.0
      %2068 = vmatpush2.msra.mxu0 0.0
      %2069 = vmatprep.subr.mxu0 0.0
      %2070 = vmatpush2.msra.mxu0 0.0
      %2071 = vmatprep.mubr.f32.mxu0 0.0
      %2072 = vmatmul.mubr.f32.gmra.mxu0 %v1908
      %v2073 = vpop.f32.mrf.mxu0
      %v2074 = vadd.f32 %v1904, %v2073
      %v2075 = vpop.f32.mrf.mxu0
      %2076 = vmatprep.mubr.f32.mxu0 0.0
      %2077 = vmatmul.mubr.f32.gmra.mxu0 %v1911
      %v2078 = vpop.f32.mrf.mxu0
      %v2079 = vadd.f32 %v1904, %v2078
      %v2080 = vpop.f32.mrf.mxu0
      %2081 = vmatprep.mubr.f32.mxu0 0.0
      %2082 = vmatmul.mubr.f32.gmra.mxu0 %v1914
      %v2083 = vpop.f32.mrf.mxu0
      %v2084 = vadd.f32 %v1904, %v2083
      %v2085 = vpop.f32.mrf.mxu0
      %2086 = vmatprep.mubr.f32.mxu0 0.0
      %2087 = vmatmul.mubr.f32.gmra.mxu0 %v1917
      %v2088 = vpop.f32.mrf.mxu0
      %v2089 = vadd.f32 %v1904, %v2088
      %v2090 = vpop.f32.mrf.mxu0
      %2091 = vmatprep.mubr.f32.mxu0 0.0
      %2092 = vmatmul.mubr.f32.gmra.mxu0 %v1920
      %v2093 = vpop.f32.mrf.mxu0
      %v2094 = vadd.f32 %v1904, %v2093
      %v2095 = vpop.f32.mrf.mxu0
      %2096 = vmatprep.mubr.f32.mxu0 0.0
      %2097 = vmatmul.mubr.f32.gmra.mxu0 %v1923
      %v2098 = vpop.f32.mrf.mxu0
      %v2099 = vadd.f32 %v1904, %v2098
      %v2100 = vpop.f32.mrf.mxu0
      %2101 = vmatprep.mubr.f32.mxu0 0.0
      %2102 = vmatmul.mubr.f32.gmra.mxu0 %v1926
      %v2103 = vpop.f32.mrf.mxu0
      %v2104 = vadd.f32 %v1904, %v2103
      %v2105 = vpop.f32.mrf.mxu0
      %2106 = vmatprep.mubr.f32.mxu0 0.0
      %2107 = vmatmul.mubr.f32.gmra.mxu0 %v1929
      %v2108 = vpop.f32.mrf.mxu0
      %v2109 = vadd.f32 %v1904, %v2108
      %v2110 = vpop.f32.mrf.mxu0
      %2111 = vmatprep.mubr.f32.mxu0 0.0
      %2112 = vmatmul.mubr.f32.gmra.mxu0 %v1932
      %v2113 = vpop.f32.mrf.mxu0
      %v2114 = vadd.f32 %v1904, %v2113
      %v2115 = vpop.f32.mrf.mxu0
      %2116 = vmatprep.mubr.f32.mxu0 0.0
      %2117 = vmatmul.mubr.f32.gmra.mxu0 %v1935
      %v2118 = vpop.f32.mrf.mxu0
      %v2119 = vadd.f32 %v1904, %v2118
      %v2120 = vpop.f32.mrf.mxu0
      %2121 = vmatprep.mubr.f32.mxu0 0.0
      %2122 = vmatmul.mubr.f32.gmra.mxu0 %v1938
      %v2123 = vpop.f32.mrf.mxu0
      %v2124 = vadd.f32 %v1904, %v2123
      %v2125 = vpop.f32.mrf.mxu0
      %2126 = vmatprep.mubr.f32.mxu0 0.0
      %2127 = vmatmul.mubr.f32.gmra.mxu0 %v1941
      %v2128 = vpop.f32.mrf.mxu0
      %v2129 = vadd.f32 %v1904, %v2128
      %v2130 = vpop.f32.mrf.mxu0
      %2131 = vmatprep.mubr.f32.mxu0 0.0
      %2132 = vmatmul.mubr.f32.gmra.mxu0 %v1944
      %v2133 = vpop.f32.mrf.mxu0
      %v2134 = vadd.f32 %v1904, %v2133
      %v2135 = vpop.f32.mrf.mxu0
      %2136 = vmatprep.mubr.f32.mxu0 0.0
      %2137 = vmatmul.mubr.f32.gmra.mxu0 %v1947
      %v2138 = vpop.f32.mrf.mxu0
      %v2139 = vadd.f32 %v1904, %v2138
      %v2140 = vpop.f32.mrf.mxu0
      %2141 = vmatprep.mubr.f32.mxu0 0.0
      %2142 = vmatmul.mubr.f32.gmra.mxu0 %v1950
      %v2143 = vpop.f32.mrf.mxu0
      %v2144 = vadd.f32 %v1904, %v2143
      %v2145 = vpop.f32.mrf.mxu0
      %2146 = vmatprep.mubr.f32.mxu0 0.0
      %2147 = vmatmul.mubr.f32.gmra.mxu0 %v1953
      %v2148 = vpop.f32.mrf.mxu0
      %v2149 = vadd.f32 %v1904, %v2148
      %v2150 = vpop.f32.mrf.mxu0
      %2151 = vmatprep.mubr.f32.mxu0 0.0
      %2152 = vmatmul.mubr.f32.gmra.mxu0 %v1956
      %v2153 = vpop.f32.mrf.mxu0
      %v2154 = vadd.f32 %v1904, %v2153
      %v2155 = vpop.f32.mrf.mxu0
      %2156 = vmatprep.mubr.f32.mxu0 0.0
      %2157 = vmatmul.mubr.f32.gmra.mxu0 %v1959
      %v2158 = vpop.f32.mrf.mxu0
      %v2159 = vadd.f32 %v1904, %v2158
      %v2160 = vpop.f32.mrf.mxu0
      %2161 = vmatprep.mubr.f32.mxu0 0.0
      %2162 = vmatmul.mubr.f32.gmra.mxu0 %v1962
      %v2163 = vpop.f32.mrf.mxu0
      %v2164 = vadd.f32 %v1904, %v2163
      %v2165 = vpop.f32.mrf.mxu0
      %2166 = vmatprep.mubr.f32.mxu0 0.0
      %2167 = vmatmul.mubr.f32.gmra.mxu0 %v1965
      %v2168 = vpop.f32.mrf.mxu0
      %v2169 = vadd.f32 %v1904, %v2168
      %v2170 = vpop.f32.mrf.mxu0
      %2171 = vmatprep.mubr.f32.mxu0 0.0
      %2172 = vmatmul.mubr.f32.gmra.mxu0 %v1968
      %v2173 = vpop.f32.mrf.mxu0
      %v2174 = vadd.f32 %v1904, %v2173
      %v2175 = vpop.f32.mrf.mxu0
      %2176 = vmatprep.mubr.f32.mxu0 0.0
      %2177 = vmatmul.mubr.f32.gmra.mxu0 %v1971
      %v2178 = vpop.f32.mrf.mxu0
      %v2179 = vadd.f32 %v1904, %v2178
      %v2180 = vpop.f32.mrf.mxu0
      %2181 = vmatprep.mubr.f32.mxu0 0.0
      %2182 = vmatmul.mubr.f32.gmra.mxu0 %v1974
      %v2183 = vpop.f32.mrf.mxu0
      %v2184 = vadd.f32 %v1904, %v2183
      %v2185 = vpop.f32.mrf.mxu0
      %2186 = vmatprep.mubr.f32.mxu0 0.0
      %2187 = vmatmul.mubr.f32.gmra.mxu0 %v1977
      %v2188 = vpop.f32.mrf.mxu0
      %v2189 = vadd.f32 %v1904, %v2188
      %v2190 = vpop.f32.mrf.mxu0
      %2191 = vmatprep.mubr.f32.mxu0 0.0
      %2192 = vmatmul.mubr.f32.gmra.mxu0 %v1980
      %v2193 = vpop.f32.mrf.mxu0
      %v2194 = vadd.f32 %v1904, %v2193
      %v2195 = vpop.f32.mrf.mxu0
      %2196 = vmatprep.mubr.f32.mxu0 0.0
      %2197 = vmatmul.mubr.f32.gmra.mxu0 %v1983
      %v2198 = vpop.f32.mrf.mxu0
      %v2199 = vadd.f32 %v1904, %v2198
      %v2200 = vpop.f32.mrf.mxu0
      %2201 = vmatprep.mubr.f32.mxu0 0.0
      %2202 = vmatmul.mubr.f32.gmra.mxu0 %v1986
      %v2203 = vpop.f32.mrf.mxu0
      %v2204 = vadd.f32 %v1904, %v2203
      %v2205 = vpop.f32.mrf.mxu0
      %2206 = vmatprep.mubr.f32.mxu0 0.0
      %2207 = vmatmul.mubr.f32.gmra.mxu0 %v1989
      %v2208 = vpop.f32.mrf.mxu0
      %v2209 = vadd.f32 %v1904, %v2208
      %v2210 = vpop.f32.mrf.mxu0
      %2211 = vmatprep.mubr.f32.mxu0 0.0
      %2212 = vmatmul.mubr.f32.gmra.mxu0 %v1992
      %v2213 = vpop.f32.mrf.mxu0
      %v2214 = vadd.f32 %v1904, %v2213
      %v2215 = vpop.f32.mrf.mxu0
      %2216 = vmatprep.mubr.f32.mxu0 0.0
      %2217 = vmatmul.mubr.f32.gmra.mxu0 %v1995
      %v2218 = vpop.f32.mrf.mxu0
      %v2219 = vadd.f32 %v1904, %v2218
      %v2220 = vpop.f32.mrf.mxu0
      %2221 = vmatprep.mubr.f32.mxu0 0.0
      %2222 = vmatmul.mubr.f32.gmra.mxu0 %v1998
      %v2223 = vpop.f32.mrf.mxu0
      %v2224 = vadd.f32 %v1904, %v2223
      %v2225 = vpop.f32.mrf.mxu0
      %2226 = vmatprep.mubr.f32.mxu0 0.0
      %2227 = vmatmul.mubr.f32.gmra.mxu0 %v2001
      %v2228 = vpop.f32.mrf.mxu0
      %v2229 = vadd.f32 %v1904, %v2228
      %v2230 = vpop.f32.mrf.mxu0
      %2231 = vdwg.mxu0
      %v2232 = vmax.f32 %v2074, 0.0
      %v2233 = vmax.f32 %v2079, 0.0
      %v2234 = vmax.f32 %v2084, 0.0
      %v2235 = vmax.f32 %v2089, 0.0
      %v2236 = vmax.f32 %v2094, 0.0
      %v2237 = vmax.f32 %v2099, 0.0
      %v2238 = vmax.f32 %v2104, 0.0
      %v2239 = vmax.f32 %v2109, 0.0
      %v2240 = vmax.f32 %v2114, 0.0
      %v2241 = vmax.f32 %v2119, 0.0
      %v2242 = vmax.f32 %v2124, 0.0
      %v2243 = vmax.f32 %v2129, 0.0
      %v2244 = vmax.f32 %v2134, 0.0
      %v2245 = vmax.f32 %v2139, 0.0
      %v2246 = vmax.f32 %v2144, 0.0
      %v2247 = vmax.f32 %v2149, 0.0
      %v2248 = vmax.f32 %v2154, 0.0
      %v2249 = vmax.f32 %v2159, 0.0
      %v2250 = vmax.f32 %v2164, 0.0
      %v2251 = vmax.f32 %v2169, 0.0
      %v2252 = vmax.f32 %v2174, 0.0
      %v2253 = vmax.f32 %v2179, 0.0
      %v2254 = vmax.f32 %v2184, 0.0
      %v2255 = vmax.f32 %v2189, 0.0
      %v2256 = vmax.f32 %v2194, 0.0
      %v2257 = vmax.f32 %v2199, 0.0
      %v2258 = vmax.f32 %v2204, 0.0
      %v2259 = vmax.f32 %v2209, 0.0
      %v2260 = vmax.f32 %v2214, 0.0
      %v2261 = vmax.f32 %v2219, 0.0
      %v2262 = vmax.f32 %v2224, 0.0
      %v2263 = vmax.f32 %v2229, 0.0
      %2264 = vst [vmem:[%s238] sm:$0xff] %v2232
      %2265 = vst [vmem:[%s238 + $0x8] sm:$0xff] %v2233
      %2266 = vst [vmem:[%s238 + $0x10] sm:$0xff] %v2234
      %2267 = vst [vmem:[%s238 + $0x18] sm:$0xff] %v2235
      %2268 = vst [vmem:[%s238 + $0x20] sm:$0xff] %v2236
      %2269 = vst [vmem:[%s238 + $0x28] sm:$0xff] %v2237
      %2270 = vst [vmem:[%s238 + $0x30] sm:$0xff] %v2238
      %2271 = vst [vmem:[%s238 + $0x38] sm:$0xff] %v2239
      %2272 = vst [vmem:[%s238 + $0x40] sm:$0xff] %v2240
      %2273 = vst [vmem:[%s238 + $0x48] sm:$0xff] %v2241
      %2274 = vst [vmem:[%s238 + $0x50] sm:$0xff] %v2242
      %2275 = vst [vmem:[%s238 + $0x58] sm:$0xff] %v2243
      %2276 = vst [vmem:[%s238 + $0x60] sm:$0xff] %v2244
      %2277 = vst [vmem:[%s238 + $0x68] sm:$0xff] %v2245
      %2278 = vst [vmem:[%s238 + $0x70] sm:$0xff] %v2246
      %2279 = vst [vmem:[%s238 + $0x78] sm:$0xff] %v2247
      %2280 = vst [vmem:[%s238 + $0x80] sm:$0xff] %v2248
      %2281 = vst [vmem:[%s238 + $0x88] sm:$0xff] %v2249
      %2282 = vst [vmem:[%s238 + $0x90] sm:$0xff] %v2250
      %2283 = vst [vmem:[%s238 + $0x98] sm:$0xff] %v2251
      %2284 = vst [vmem:[%s238 + $0xa0] sm:$0xff] %v2252
      %2285 = vst [vmem:[%s238 + $0xa8] sm:$0xff] %v2253
      %2286 = vst [vmem:[%s238 + $0xb0] sm:$0xff] %v2254
      %2287 = vst [vmem:[%s238 + $0xb8] sm:$0xff] %v2255
      %2288 = vst [vmem:[%s238 + $0xc0] sm:$0xff] %v2256
      %2289 = vst [vmem:[%s238 + $0xc8] sm:$0xff] %v2257
      %2290 = vst [vmem:[%s238 + $0xd0] sm:$0xff] %v2258
      %2291 = vst [vmem:[%s238 + $0xd8] sm:$0xff] %v2259
      %2292 = vst [vmem:[%s238 + $0xe0] sm:$0xff] %v2260
      %2293 = vst [vmem:[%s238 + $0xe8] sm:$0xff] %v2261
      %2294 = vst [vmem:[%s238 + $0xf0] sm:$0xff] %v2262
      %2295 = vst [vmem:[%s238 + $0xf8] sm:$0xff] %v2263
      %s2296 = smul.u32 32, %s20
      %p2297 = scmp.lt.s32.totalorder %s19, 1
      %s2298 = scalar_select %p2297, %s19, 1
      %p2299 = scmp.lt.s32.totalorder %s2296, 31
      %s2300 = scalar_select %p2299, %s2296, 31
      %p2301 = scmp.lt.s32.totalorder %s21, 0
      %s2302 = scalar_select %p2301, %s21, 0
      %s2303 = sadd.s32 %s2302, %s2300
      %s2304 = smul.addr %s2298, 32
      %s2305 = sadd.s32 %s2303, %s2304
      %s2306 = smul.addr %s2305, 8
      %s2307 = scalar_lea.vmem %s3, %s2306
      // Predicated region
      $region37: #{duc_forward.1} parent=31 // pred_check
        %p2308 = pneg %p133
      $region38: #{duc_forward.1} parent=31 // pred_check_branch
        %2310 = sbr.rel (%p2308) target = $region40
      $region39: #{duc_forward.1} parent=31 // pred_region
        %s2311 = smul.u32 32, %s20
      $region40: #{duc_forward.1} parent=31 // pred_fallthru
        _
    $region32: #{duc_forward.1} parent=5 // pred_fallthru
      _
    %p2312 = scmp.le.s32.totalorder 2, %s9
    // Predicated region
    $region41: #{duc_forward.1} parent=5 // pred_check
      %p2313 = pneg %p2312
    $region42: #{duc_forward.1} parent=5 // pred_check_branch
      %2315 = sbr.rel (%p2313) target = $region44
    $region43: #{duc_forward.1} parent=5 // pred_region
      %s2316 = ssub.s32 %s9, 2
      // Predicated region
      $region45: #{duc_forward.1} parent=43 // pred_check
        %p2317 = pneg %p139
      $region46: #{duc_forward.1} parent=43 // pred_check_branch
        %2319 = sbr.rel (%p2317) target = $region48
      $region47: #{duc_forward.1} parent=43 // pred_region
        %s2320 = smul.u32 32, %s23
        %p2321 = scmp.lt.s32.totalorder %s22, 1
        %s2322 = scalar_select %p2321, %s22, 1
        %p2323 = scmp.lt.s32.totalorder %s2320, 31
        %s2324 = scalar_select %p2323, %s2320, 31
        %p2325 = scmp.lt.s32.totalorder %s24, 0
        %s2326 = scalar_select %p2325, %s24, 0
        %s2327 = sadd.s32 %s2326, %s2324
        %s2328 = smul.addr %s2322, 32
        %s2329 = sadd.s32 %s2327, %s2328
        %s2330 = smul.addr %s2329, 8
        %s2331 = scalar_lea.vmem %s3, %s2330
      $region48: #{duc_forward.1} parent=43 // pred_fallthru
        _
    $region44: #{duc_forward.1} parent=5 // pred_fallthru
      _
  $region6: #{duc_forward.1} parent=0 // loop_footer
    %s13 = sadd.s32 1, %s9
  $region7: #{duc_forward.1} parent=0 // loop_footer_branch
    %8 = sbr.rel target = $region3
  $region8: #{duc_forward.1} parent=0 // loop_exit
    _

</llo_original>
